<compile_context>
chip_gen: v6e
topology: v6e:2x2x1
jax: 0.10.0
libtpu: 0.0.40
codegen_flags: <defaults>
</compile_context>

<pallas_src>
import functools

import jax
import jax.numpy as jnp
import numpy as np
from jax.experimental import pallas as pl
from jax.experimental.pallas import tpu as pltpu


def _round_up(x, m):
    return ((x + m - 1) // m) * m


# ----------------------------------------------------------------------------
# The single fused Pallas kernel
# ----------------------------------------------------------------------------
def _fused_forward_kernel(*refs, aux):
    if aux:
        (x_ref, w1_ref, b1_ref, w2_ref, b2_ref, w3_ref, b3_ref,
         w4_ref, b4_ref, waux_ref, baux_ref, out_ref, aux_ref) = refs
    else:
        (x_ref, w1_ref, b1_ref, w2_ref, b2_ref, w3_ref, b3_ref,
         w4_ref, b4_ref, out_ref) = refs

    f32 = jnp.float32
    bf16 = jnp.bfloat16

    x = x_ref[...].astype(bf16)                                     # (bm, 256)

    # conv1, all four 2x2-pool corners, as ONE wide bf16 GEMM (K=256, N=1536).
    # Corner slabs live at 128-aligned column offsets -> lane-aligned slices.
    h1 = jnp.dot(x, w1_ref[...], preferred_element_type=f32)        # (bm, 1536)
    h1a = h1[:, 0:384]
    h1b = h1[:, 384:768]
    h1c = h1[:, 768:1152]
    h1d = h1[:, 1152:1536]
    # pool = max of the four corners; bias is per-channel so it commutes with max.
    h1p = jnp.maximum(jnp.maximum(h1a, h1b), jnp.maximum(h1c, h1d)) + b1_ref[...]
    h1p = jnp.maximum(h1p, 0.0)          # (bm, 384) f32; columns 288.. are zero
    h1p_bf = h1p.astype(bf16)

    if aux:  # fcaux on the pooled map (NCHW flatten folded into waux rows)
        aux_ref[...] = (jnp.dot(h1p_bf, waux_ref[...], preferred_element_type=f32)
                        + baux_ref[...]).astype(aux_ref.dtype)       # (bm, 128)

    # conv2 + ReLU as one GEMM; output columns already in PyTorch NCHW order.
    h2 = jnp.maximum(jnp.dot(h1p_bf, w2_ref[...], preferred_element_type=f32)
                     + b2_ref[...], 0.0)                             # (bm, 256)
    # fc1 + ReLU (columns zero-padded 200 -> 256).
    h3 = jnp.maximum(jnp.dot(h2.astype(bf16), w3_ref[...],
                             preferred_element_type=f32)
                     + b3_ref[...], 0.0)                             # (bm, 256)
    # fc2 (columns zero-padded 10 -> 128 for a lane-dense store).
    out_ref[...] = (jnp.dot(h3.astype(bf16), w4_ref[...],
                            preferred_element_type=f32)
                    + b4_ref[...]).astype(out_ref.dtype)             # (bm, 128)


# ----------------------------------------------------------------------------
# One-time parameter repacking (trace-level; conv folding is exact, then bf16)
# ----------------------------------------------------------------------------
_DN = ("NCHW", "OIHW", "NCHW")
_HP = jax.lax.Precision.HIGHEST


def _pad2(a, rows, cols):
    r, c = a.shape
    return jnp.pad(a, ((0, rows - r), (0, cols - c)))


def pack_params(params, *, aux=False):
    """Repack PyTorch-layout params into the lane-padded bf16 GEMM operands the
    fused kernel consumes.  Convs are folded into dense matrices by applying them
    to basis vectors (exact: entries are copies of the weights); biases stay f32."""
    f32 = jnp.float32
    bf16 = jnp.bfloat16
    w1 = params["conv1_w"].astype(f32)            # (8, 1, 3, 3)
    b1 = params["conv1_b"].astype(f32)            # (8,)
    w2 = params["conv2_w"].astype(f32)            # (16, 8, 3, 3)
    b2 = params["conv2_b"].astype(f32)            # (16,)

    # conv1 -> four dense (196, 288) matrices, one per pool corner (a, b).
    # Row-pad 196->256 (matches the lane-padded x), column-pad 288->384, and
    # concatenate along N into one (256, 1536) bf16 weight (128-aligned slabs).
    eye1 = jnp.eye(14 * 14, dtype=f32).reshape(14 * 14, 1, 14, 14)
    y1 = jax.lax.conv_general_dilated(eye1, w1, (1, 1), "VALID",
                                      dimension_numbers=_DN, precision=_HP)
    y1 = y1.reshape(196, 8, 6, 2, 6, 2)           # (p, co, i, a, j, b)
    y1 = jnp.transpose(y1, (0, 3, 5, 2, 4, 1))    # (p, a, b, i, j, co)
    y1 = y1.reshape(196, 4, 6 * 6 * 8)
    corners = [_pad2(y1[:, c, :], 256, 384) for c in range(4)]
    w1_wide = jnp.concatenate(corners, axis=1).astype(bf16)          # (256, 1536)
    b1_row = jnp.pad(jnp.tile(b1, 6 * 6), (0, 384 - 288)).reshape(1, 384)  # f32

    # conv2 -> dense (288, 256): input columns = NHWC(6,6,8) order (== h1p),
    # output columns = PyTorch NCHW .view(-1, 256) order.  Row-pad 288 -> 384.
    eye2 = jnp.eye(6 * 6 * 8, dtype=f32).reshape(288, 6, 6, 8)
    eye2 = jnp.transpose(eye2, (0, 3, 1, 2))      # NCHW basis images
    y2 = jax.lax.conv_general_dilated(eye2, w2, (1, 1), "VALID",
                                      dimension_numbers=_DN, precision=_HP)
    w2_dense = _pad2(y2.reshape(288, 16 * 4 * 4), 384, 256).astype(bf16)
    b2_row = jnp.repeat(b2, 4 * 4).reshape(1, 256)                   # f32

    # fc1: (nb_hidden, 256) -> T -> pad columns nb_hidden -> nh_pad (lane-dense).
    nh = params["fc1_w"].shape[0]
    nh_pad = max(128, _round_up(nh, 128))
    w3 = _pad2(params["fc1_w"].T.astype(f32), 256, nh_pad).astype(bf16)
    b3_row = jnp.pad(params["fc1_b"].astype(f32), (0, nh_pad - nh)).reshape(1, nh_pad)
    # fc2: (10, nb_hidden) -> T -> pad to (nh_pad, 128) (lane-dense output).
    w4 = _pad2(params["fc2_w"].T.astype(f32), nh_pad, 128).astype(bf16)
    b4_row = jnp.pad(params["fc2_b"].astype(f32), (0, 128 - 10)).reshape(1, 128)

    packed = {"w1": w1_wide, "b1": b1_row, "w2": w2_dense, "b2": b2_row,
              "w3": w3, "b3": b3_row, "w4": w4, "b4": b4_row}
    if aux:
        # fcaux expects the PyTorch NCHW flatten (c, i, j) of the pooled map;
        # permute its weight ROWS so it consumes h1p's NHWC columns directly,
        # then row-pad 288 -> 384 to match h1p's padded width.
        idx = jnp.arange(288)
        perm = (idx % 8) * 36 + idx // 8
        waux = params["fcaux_w"].T.astype(f32)[perm]                  # (288, 10)
        packed["waux"] = _pad2(waux, 384, 128).astype(bf16)
        packed["baux"] = jnp.pad(params["fcaux_b"].astype(f32),
                                 (0, 128 - 10)).reshape(1, 128)
    return packed


# ----------------------------------------------------------------------------
# Batch tiling: big tiles (fill the 256-row MXU), >= 2 grid steps when possible
# ----------------------------------------------------------------------------
def _pick_block_rows(n):
    n_rows = _round_up(max(n, 1), 8)
    if n_rows <= 8:
        return 8, 8
    # Keep >= 2 grid steps when the batch allows so the "parallel" axis can
    # shard across v7x's two TensorCores; cap at 256 rows (v6e/v7x MXU height).
    bm = min(256, max(8, _round_up((n_rows + 1) // 2, 8)))
    return bm, _round_up(n_rows, bm)


# ----------------------------------------------------------------------------
# Forward pass (== DigitSubnetwork.forward), a single pallas_call
# ----------------------------------------------------------------------------
def digit_subnetwork_forward(packed, x_nchw, *, aux=False):
    n = x_nchw.shape[0]
    xf = x_nchw.reshape(n, 14 * 14).astype(jnp.float32)  # C=1: NCHW flatten = (h, w)

    bm, n_pad = _pick_block_rows(n)
    # Zero-pad batch rows to the tile and columns 196 -> 256 (lane-dense x load;
    # the matching conv1 weight rows are zero, so this is exact).
    xf = jnp.pad(xf, ((0, n_pad - n), (0, 256 - 196)))

    weights = [packed["w1"], packed["b1"], packed["w2"], packed["b2"],
               packed["w3"], packed["b3"], packed["w4"], packed["b4"]]
    if aux:
        weights += [packed["waux"], packed["baux"]]

    in_specs = [pl.BlockSpec((bm, 256), lambda i: (i, 0))]
    in_specs += [pl.BlockSpec(w.shape, lambda i: (0, 0)) for w in weights]  # VMEM-resident

    out_shape = [jax.ShapeDtypeStruct((n_pad, 128), jnp.float32)]
    out_specs = [pl.BlockSpec((bm, 128), lambda i: (i, 0))]
    if aux:
        out_shape.append(jax.ShapeDtypeStruct((n_pad, 128), jnp.float32))
        out_specs.append(pl.BlockSpec((bm, 128), lambda i: (i, 0)))

    # Advisory cost estimate so XLA can overlap this call with surrounding ops.
    mm_weights = [packed["w1"], packed["w2"], packed["w3"], packed["w4"]]
    if aux:
        mm_weights.append(packed["waux"])
    flops = 2 * n_pad * sum(int(w.shape[0]) * int(w.shape[1]) for w in mm_weights)
    weight_bytes = sum(int(np.prod(w.shape)) * w.dtype.itemsize for w in weights)
    io_bytes = n_pad * 256 * 4 + n_pad * 128 * 4 * (2 if aux else 1)
    cost = pl.CostEstimate(flops=flops, transcendentals=0,
                           bytes_accessed=weight_bytes + io_bytes)

    outs = pl.pallas_call(
        functools.partial(_fused_forward_kernel, aux=aux),
        out_shape=tuple(out_shape),
        grid=(n_pad // bm,),
        in_specs=in_specs,
        out_specs=tuple(out_specs),
        compiler_params=pltpu.CompilerParams(
            dimension_semantics=("parallel",),
            vmem_limit_bytes=32 * 1024 * 1024),
        cost_estimate=cost,
    )(xf, *weights)

    out = outs[0][:n, :10]
    aux_out = outs[1][:n, :10] if aux else None
    return out, aux_out


# ----------------------------------------------------------------------------
# Parameters (deterministic synthetic init, PyTorch-layout shapes)
# ----------------------------------------------------------------------------
def init_params(key, aux=False, nb_hidden=200):
    ks = jax.random.split(key, 5)

    def lin_init(k, fan_in, shape_w, shape_b):
        bound = 1.0 / np.sqrt(fan_in)
        kw, kb = jax.random.split(k)
        w = jax.random.uniform(kw, shape_w, jnp.float32, -bound, bound)
        b = jax.random.uniform(kb, shape_b, jnp.float32, -bound, bound)
        return w, b

    p = {}
    p["conv1_w"], p["conv1_b"] = lin_init(ks[0], 1 * 3 * 3, (8, 1, 3, 3), (8,))
    p["conv2_w"], p["conv2_b"] = lin_init(ks[1], 8 * 3 * 3, (16, 8, 3, 3), (16,))
    p["fc1_w"], p["fc1_b"] = lin_init(ks[2], 4 * 4 * 16, (nb_hidden, 4 * 4 * 16), (nb_hidden,))
    p["fc2_w"], p["fc2_b"] = lin_init(ks[3], nb_hidden, (10, nb_hidden), (10,))
    if aux:
        p["fcaux_w"], p["fcaux_b"] = lin_init(ks[4], 6 * 6 * 8, (10, 6 * 6 * 8), (10,))
    return p


# ----------------------------------------------------------------------------
# Pure-JAX reference (sanity check only)
# ----------------------------------------------------------------------------
def reference_forward(params, x, *, aux=False):
    h = jax.lax.conv_general_dilated(x, params["conv1_w"], (1, 1), "VALID",
                                     dimension_numbers=_DN, precision=_HP)
    h = h + params["conv1_b"][None, :, None, None]
    h = jax.lax.reduce_window(h, -jnp.inf, jax.lax.max,
                              (1, 1, 2, 2), (1, 1, 2, 2), "VALID")
    h = jax.nn.relu(h)
    aux_out = None
    if aux:
        aux_out = jnp.dot(h.reshape(h.shape[0], -1), params["fcaux_w"].T,
                          precision=_HP) + params["fcaux_b"]
    h = jax.lax.conv_general_dilated(h, params["conv2_w"], (1, 1), "VALID",
                                     dimension_numbers=_DN, precision=_HP)
    h = jax.nn.relu(h + params["conv2_b"][None, :, None, None])
    flat = h.reshape(h.shape[0], -1)
    h = jax.nn.relu(jnp.dot(flat, params["fc1_w"].T, precision=_HP) + params["fc1_b"])
    out = jnp.dot(h, params["fc2_w"].T, precision=_HP) + params["fc2_b"]
    return out, aux_out


if __name__ == "__main__":
    key = jax.random.PRNGKey(0)
    pkey, xkey = jax.random.split(key)
    x = jax.random.normal(xkey, (2, 1, 14, 14), jnp.float32)   # NCHW 14x14 digit crops

    # Default configuration (aux=False): aux output stays None.
    params = init_params(pkey, aux=False)
    packed = pack_params(params, aux=False)
    out, aux_out = digit_subnetwork_forward(packed, x, aux=False)
    out = jax.block_until_ready(out)
    assert out.shape == (2, 10) and aux_out is None

    ref, _ = reference_forward(params, x, aux=False)
    # bf16 matmul operands with f32 accumulation: measured error is ~1e-3 absolute
    # on ~5e-2-magnitude logits, so the 2e-2 tolerance keeps ~10x margin.
    np.testing.assert_allclose(np.asarray(out), np.asarray(ref), rtol=2e-2, atol=2e-2)

    # Exercise and verify the aux head as well.
    params_aux = init_params(pkey, aux=True)
    packed_aux = pack_params(params_aux, aux=True)
    out2, aux2 = digit_subnetwork_forward(packed_aux, x, aux=True)
    jax.block_until_ready((out2, aux2))
    assert out2.shape == (2, 10) and aux2.shape == (2, 10)
    ref2, refaux2 = reference_forward(params_aux, x, aux=True)
    np.testing.assert_allclose(np.asarray(out2), np.asarray(ref2), rtol=2e-2, atol=2e-2)
    np.testing.assert_allclose(np.asarray(aux2), np.asarray(refaux2), rtol=2e-2, atol=2e-2)

    print("KERNEL_OK")
</pallas_src>

<mosaic_0001>
module attributes {stable_mosaic.version = 11 : i64} {
  func.func @_fused_forward_kernel(%arg0: i32, %arg1: memref<8x256xf32, #tpu.memory_space<vmem>>, %arg2: memref<256x1536xbf16, #tpu.memory_space<vmem>>, %arg3: memref<1x384xf32, #tpu.memory_space<vmem>>, %arg4: memref<384x256xbf16, #tpu.memory_space<vmem>>, %arg5: memref<1x256xf32, #tpu.memory_space<vmem>>, %arg6: memref<256x256xbf16, #tpu.memory_space<vmem>>, %arg7: memref<1x256xf32, #tpu.memory_space<vmem>>, %arg8: memref<256x128xbf16, #tpu.memory_space<vmem>>, %arg9: memref<1x128xf32, #tpu.memory_space<vmem>>, %arg10: memref<8x128xf32, #tpu.memory_space<vmem>>) attributes {dimension_semantics = [#tpu.dimension_semantics<parallel>], iteration_bounds = array<i64: 1>, scalar_prefetch = 0 : i64, scratch_operands = 0 : i64, tpu.core_type = #tpu.core_type<tc>, window_params = [{transform_indices = @transform_0, window_bounds = array<i64: 8, 256>}, {pipeline_mode = #tpu.pipeline_mode<synchronous>, transform_indices = @transform_1, window_bounds = array<i64: 256, 1536>}, {pipeline_mode = #tpu.pipeline_mode<synchronous>, transform_indices = @transform_2, window_bounds = array<i64: 1, 384>}, {pipeline_mode = #tpu.pipeline_mode<synchronous>, transform_indices = @transform_3, window_bounds = array<i64: 384, 256>}, {pipeline_mode = #tpu.pipeline_mode<synchronous>, transform_indices = @transform_4, window_bounds = array<i64: 1, 256>}, {pipeline_mode = #tpu.pipeline_mode<synchronous>, transform_indices = @transform_5, window_bounds = array<i64: 256, 256>}, {pipeline_mode = #tpu.pipeline_mode<synchronous>, transform_indices = @transform_6, window_bounds = array<i64: 1, 256>}, {pipeline_mode = #tpu.pipeline_mode<synchronous>, transform_indices = @transform_7, window_bounds = array<i64: 256, 128>}, {pipeline_mode = #tpu.pipeline_mode<synchronous>, transform_indices = @transform_8, window_bounds = array<i64: 1, 128>}, {transform_indices = @transform_9, window_bounds = array<i64: 8, 128>}]} {
    %c0 = arith.constant 0 : index
    %c0_0 = arith.constant 0 : index
    %0 = vector.load %arg1[%c0, %c0_0] : memref<8x256xf32, #tpu.memory_space<vmem>>, vector<8x256xf32>
    %1 = arith.truncf %0 : vector<8x256xf32> to vector<8x256xbf16>
    %c0_1 = arith.constant 0 : index
    %c0_2 = arith.constant 0 : index
    %2 = vector.load %arg2[%c0_1, %c0_2] : memref<256x1536xbf16, #tpu.memory_space<vmem>>, vector<256x1536xbf16>
    %cst = arith.constant dense<0.000000e+00> : vector<8x1536xf32>
    %3 = tpu.matmul %1, %2, %cst {dimension_numbers = #tpu.dot_dimension_numbers<[1], [0], [0], [1], [0, 0, 1, 1], [], []>} : vector<8x256xbf16>, vector<256x1536xbf16>, vector<8x1536xf32> -> vector<8x1536xf32>
    %4 = vector.extract_strided_slice %3 {offsets = [0, 0], sizes = [8, 384], strides = [1, 1]} : vector<8x1536xf32> to vector<8x384xf32>
    %5 = vector.extract_strided_slice %3 {offsets = [0, 384], sizes = [8, 384], strides = [1, 1]} : vector<8x1536xf32> to vector<8x384xf32>
    %6 = vector.extract_strided_slice %3 {offsets = [0, 768], sizes = [8, 384], strides = [1, 1]} : vector<8x1536xf32> to vector<8x384xf32>
    %7 = vector.extract_strided_slice %3 {offsets = [0, 1152], sizes = [8, 384], strides = [1, 1]} : vector<8x1536xf32> to vector<8x384xf32>
    %8 = arith.maximumf %4, %5 : vector<8x384xf32>
    %9 = arith.maximumf %6, %7 : vector<8x384xf32>
    %10 = arith.maximumf %8, %9 : vector<8x384xf32>
    %c0_3 = arith.constant 0 : index
    %c0_4 = arith.constant 0 : index
    %11 = vector.load %arg3[%c0_3, %c0_4] : memref<1x384xf32, #tpu.memory_space<vmem>>, vector<1x384xf32>
    %12 = vector.broadcast %11 : vector<1x384xf32> to vector<8x384xf32>
    %13 = arith.addf %10, %12 : vector<8x384xf32>
    %cst_5 = arith.constant 0.000000e+00 : f32
    %14 = vector.broadcast %cst_5 : f32 to vector<8x384xf32>
    %15 = arith.maximumf %13, %14 : vector<8x384xf32>
    %16 = arith.truncf %15 : vector<8x384xf32> to vector<8x384xbf16>
    %c0_6 = arith.constant 0 : index
    %c0_7 = arith.constant 0 : index
    %17 = vector.load %arg4[%c0_6, %c0_7] : memref<384x256xbf16, #tpu.memory_space<vmem>>, vector<384x256xbf16>
    %cst_8 = arith.constant dense<0.000000e+00> : vector<8x256xf32>
    %18 = tpu.matmul %16, %17, %cst_8 {dimension_numbers = #tpu.dot_dimension_numbers<[1], [0], [0], [1], [0, 0, 1, 1], [], []>} : vector<8x384xbf16>, vector<384x256xbf16>, vector<8x256xf32> -> vector<8x256xf32>
    %c0_9 = arith.constant 0 : index
    %c0_10 = arith.constant 0 : index
    %19 = vector.load %arg5[%c0_9, %c0_10] : memref<1x256xf32, #tpu.memory_space<vmem>>, vector<1x256xf32>
    %20 = vector.broadcast %19 : vector<1x256xf32> to vector<8x256xf32>
    %21 = arith.addf %18, %20 : vector<8x256xf32>
    %cst_11 = arith.constant 0.000000e+00 : f32
    %22 = vector.broadcast %cst_11 : f32 to vector<8x256xf32>
    %23 = arith.maximumf %21, %22 : vector<8x256xf32>
    %24 = arith.truncf %23 : vector<8x256xf32> to vector<8x256xbf16>
    %c0_12 = arith.constant 0 : index
    %c0_13 = arith.constant 0 : index
    %25 = vector.load %arg6[%c0_12, %c0_13] : memref<256x256xbf16, #tpu.memory_space<vmem>>, vector<256x256xbf16>
    %cst_14 = arith.constant dense<0.000000e+00> : vector<8x256xf32>
    %26 = tpu.matmul %24, %25, %cst_14 {dimension_numbers = #tpu.dot_dimension_numbers<[1], [0], [0], [1], [0, 0, 1, 1], [], []>} : vector<8x256xbf16>, vector<256x256xbf16>, vector<8x256xf32> -> vector<8x256xf32>
    %c0_15 = arith.constant 0 : index
    %c0_16 = arith.constant 0 : index
    %27 = vector.load %arg7[%c0_15, %c0_16] : memref<1x256xf32, #tpu.memory_space<vmem>>, vector<1x256xf32>
    %28 = vector.broadcast %27 : vector<1x256xf32> to vector<8x256xf32>
    %29 = arith.addf %26, %28 : vector<8x256xf32>
    %cst_17 = arith.constant 0.000000e+00 : f32
    %30 = vector.broadcast %cst_17 : f32 to vector<8x256xf32>
    %31 = arith.maximumf %29, %30 : vector<8x256xf32>
    %32 = arith.truncf %31 : vector<8x256xf32> to vector<8x256xbf16>
    %c0_18 = arith.constant 0 : index
    %c0_19 = arith.constant 0 : index
    %33 = vector.load %arg8[%c0_18, %c0_19] : memref<256x128xbf16, #tpu.memory_space<vmem>>, vector<256x128xbf16>
    %cst_20 = arith.constant dense<0.000000e+00> : vector<8x128xf32>
    %34 = tpu.matmul %32, %33, %cst_20 {dimension_numbers = #tpu.dot_dimension_numbers<[1], [0], [0], [1], [0, 0, 1, 1], [], []>} : vector<8x256xbf16>, vector<256x128xbf16>, vector<8x128xf32> -> vector<8x128xf32>
    %c0_21 = arith.constant 0 : index
    %c0_22 = arith.constant 0 : index
    %35 = vector.load %arg9[%c0_21, %c0_22] : memref<1x128xf32, #tpu.memory_space<vmem>>, vector<1x128xf32>
    %36 = vector.broadcast %35 : vector<1x128xf32> to vector<8x128xf32>
    %37 = arith.addf %34, %36 : vector<8x128xf32>
    %c0_23 = arith.constant 0 : index
    %c0_24 = arith.constant 0 : index
    %38 = vector.load %arg10[%c0_23, %c0_24] : memref<8x128xf32, #tpu.memory_space<vmem>>, vector<8x128xf32>
    tpu.vector_store %arg10[%c0_23, %c0_24], %37 {strides = array<i32>} : memref<8x128xf32, #tpu.memory_space<vmem>>, vector<8x128xf32>,
    return
  }
  func.func @transform_0(%arg0: i32) -> (i32, i32) {
    %c0_i32 = arith.constant 0 : i32
    %c0_i32_0 = arith.constant 0 : i32
    return %arg0, %c0_i32 : i32, i32
  }
  func.func @transform_1(%arg0: i32) -> (i32, i32) {
    %c0_i32 = arith.constant 0 : i32
    %c0_i32_0 = arith.constant 0 : i32
    %c0_i32_1 = arith.constant 0 : i32
    return %c0_i32, %c0_i32_0 : i32, i32
  }
  func.func @transform_2(%arg0: i32) -> (i32, i32) {
    %c0_i32 = arith.constant 0 : i32
    %c0_i32_0 = arith.constant 0 : i32
    %c0_i32_1 = arith.constant 0 : i32
    return %c0_i32, %c0_i32_0 : i32, i32
  }
  func.func @transform_3(%arg0: i32) -> (i32, i32) {
    %c0_i32 = arith.constant 0 : i32
    %c0_i32_0 = arith.constant 0 : i32
    %c0_i32_1 = arith.constant 0 : i32
    return %c0_i32, %c0_i32_0 : i32, i32
  }
  func.func @transform_4(%arg0: i32) -> (i32, i32) {
    %c0_i32 = arith.constant 0 : i32
    %c0_i32_0 = arith.constant 0 : i32
    %c0_i32_1 = arith.constant 0 : i32
    return %c0_i32, %c0_i32_0 : i32, i32
  }
  func.func @transform_5(%arg0: i32) -> (i32, i32) {
    %c0_i32 = arith.constant 0 : i32
    %c0_i32_0 = arith.constant 0 : i32
    %c0_i32_1 = arith.constant 0 : i32
    return %c0_i32, %c0_i32_0 : i32, i32
  }
  func.func @transform_6(%arg0: i32) -> (i32, i32) {
    %c0_i32 = arith.constant 0 : i32
    %c0_i32_0 = arith.constant 0 : i32
    %c0_i32_1 = arith.constant 0 : i32
    return %c0_i32, %c0_i32_0 : i32, i32
  }
  func.func @transform_7(%arg0: i32) -> (i32, i32) {
    %c0_i32 = arith.constant 0 : i32
    %c0_i32_0 = arith.constant 0 : i32
    %c0_i32_1 = arith.constant 0 : i32
    return %c0_i32, %c0_i32_0 : i32, i32
  }
  func.func @transform_8(%arg0: i32) -> (i32, i32) {
    %c0_i32 = arith.constant 0 : i32
    %c0_i32_0 = arith.constant 0 : i32
    %c0_i32_1 = arith.constant 0 : i32
    return %c0_i32, %c0_i32_0 : i32, i32
  }
  func.func @transform_9(%arg0: i32) -> (i32, i32) {
    %c0_i32 = arith.constant 0 : i32
    %c0_i32_0 = arith.constant 0 : i32
    return %arg0, %c0_i32 : i32, i32
  }
}

</mosaic_0001>

<llo_original>
// kernel: tpu_custom_call.1
$region0: #{tpu_custom_call.1}
  #allocation0 [shape = 'u32[]', space=smem, size = 0x4, offset = 0x4, fixed_abs, tag = 'smem constant byte address 0x4 - core index']
  #allocation1 [shape = 'u32[144,128]{1,0:T(1,128)}', space=vmem, size = 0x12000, scoped, tag = 'internal scratch']
  %s0 = inlined_call_operand.hbm [shape: f32[8,256], index: 0, kind: input, shape index: {}]
  %s1 = inlined_call_operand.hbm [shape: bf16[256,1536], index: 1, kind: input, shape index: {}]
  %s2 = inlined_call_operand.vmem [shape: f32[1,384], index: 2, kind: input, shape index: {}]
  %s3 = inlined_call_operand.hbm [shape: bf16[384,256], index: 3, kind: input, shape index: {}]
  %s4 = inlined_call_operand.vmem [shape: f32[1,256], index: 4, kind: input, shape index: {}]
  %s5 = inlined_call_operand.hbm [shape: bf16[256,256], index: 5, kind: input, shape index: {}]
  %s6 = inlined_call_operand.vmem [shape: f32[1,256], index: 6, kind: input, shape index: {}]
  %s7 = inlined_call_operand.hbm [shape: bf16[256,128], index: 7, kind: input, shape index: {}]
  %s8 = inlined_call_operand.vmem [shape: f32[1,128], index: 8, kind: input, shape index: {}]
  %s9 = inlined_call_operand.hbm [shape: f32[8,128], index: 9, kind: output, shape index: {}]
  %s10 = sld [smem:[#allocation0]]
  $region66: #{tpu_custom_call.1} parent=0
    _
  %s12 = ssub.s32 1, %s10
  %s13 = scalar_select 0, %s12, %s10
  $region1: #{tpu_custom_call.1} parent=0
    #allocation2 [shape = 'u8[8192]{0}', space=vmem, size = 0x2000, scoped, tag = 'input window, operand 0, single buffered']
    #allocation3 [shape = 's32[1]{0}', space=sflag, size = 0x4, scoped, tag = 'scoped memory for tpu_custom_call.1']
    #allocation4 [shape = 's32[1]{0}', space=sflag, size = 0x4, scoped, tag = 'scoped memory for tpu_custom_call.1']
    #allocation5 [shape = 'u8[786432]{0}', space=vmem, size = 0xc0000, scoped, tag = 'input window, operand 1, single buffered']
    #allocation6 [shape = 's32[1]{0}', space=sflag, size = 0x4, scoped, tag = 'scoped memory for tpu_custom_call.1']
    #allocation7 [shape = 'u8[196608]{0}', space=vmem, size = 0x30000, scoped, tag = 'input window, operand 3, single buffered']
    #allocation8 [shape = 'u8[131072]{0}', space=vmem, size = 0x20000, scoped, tag = 'input window, operand 5, single buffered']
    #allocation9 [shape = 's32[1]{0}', space=sflag, size = 0x4, scoped, tag = 'scoped memory for tpu_custom_call.1']
    #allocation10 [shape = 'u8[65536]{0}', space=vmem, size = 0x10000, scoped, tag = 'input window, operand 7, single buffered']
    #allocation11 [shape = 'u8[4096]{0}', space=vmem, size = 0x1000, scoped, tag = 'output window, operand 0, single buffered']
    %14 = vsyncpa [#allocation3], 0
    %15 = vsyncpa [#allocation6], 0
    %16 = vsyncpa [#allocation9], 0
    %17 = vsyncpa [#allocation4], 0
    // Predicated region
    $region2: #{tpu_custom_call.1} parent=1 // pred_check
      _
    $region3: #{tpu_custom_call.1} parent=1 // pred_check_branch
      %19 = sbr.rel (0) target = $region5
    $region4: #{tpu_custom_call.1} parent=1 // pred_region
      %s21 = ssub.s32 256, 256
      %22 = vsyncadd [#allocation3], %s21
      %s24 = sshll.u32 [#allocation2], 4
      %s25 = int_to_ptr.vmem [resolvable:$true] %s24
      %27 = dma.hbm_to_vmem [thread:$0]  %s0, 256, %s25, [#allocation3]
    $region5: #{tpu_custom_call.1} parent=1 // pred_fallthru
      _
    // Predicated region
    $region6: #{tpu_custom_call.1} parent=1 // pred_check
      _
    $region7: #{tpu_custom_call.1} parent=1 // pred_check_branch
      %29 = sbr.rel (0) target = $region9
    $region8: #{tpu_custom_call.1} parent=1 // pred_region
      %s31 = ssub.s32 24576, 24576
      %32 = vsyncadd [#allocation6], %s31
      %s33 = sshll.u32 [#allocation5], 4
      %s34 = int_to_ptr.vmem [resolvable:$true] %s33
      %39 = dma.hbm_to_vmem [thread:$0]  %s1, 24576, %s34, [#allocation6], 768, 768, 48
    $region9: #{tpu_custom_call.1} parent=1 // pred_fallthru
      _
    // Predicated region
    $region10: #{tpu_custom_call.1} parent=1 // pred_check
      _
    $region11: #{tpu_custom_call.1} parent=1 // pred_check_branch
      %41 = sbr.rel (0) target = $region13
    $region12: #{tpu_custom_call.1} parent=1 // pred_region
      _
    $region13: #{tpu_custom_call.1} parent=1 // pred_fallthru
      _
    // Predicated region
    $region14: #{tpu_custom_call.1} parent=1 // pred_check
      _
    $region15: #{tpu_custom_call.1} parent=1 // pred_check_branch
      %43 = sbr.rel (0) target = $region17
    $region16: #{tpu_custom_call.1} parent=1 // pred_region
      %s45 = ssub.s32 6144, 6144
      %46 = vsyncadd [#allocation6], %s45
      %s47 = sshll.u32 [#allocation7], 4
      %s48 = int_to_ptr.vmem [resolvable:$true] %s47
      %53 = dma.hbm_to_vmem [thread:$0]  %s3, 6144, %s48, [#allocation6], 128, 128, 8
    $region17: #{tpu_custom_call.1} parent=1 // pred_fallthru
      _
    // Predicated region
    $region18: #{tpu_custom_call.1} parent=1 // pred_check
      _
    $region19: #{tpu_custom_call.1} parent=1 // pred_check_branch
      %55 = sbr.rel (0) target = $region21
    $region20: #{tpu_custom_call.1} parent=1 // pred_region
      _
    $region21: #{tpu_custom_call.1} parent=1 // pred_fallthru
      _
    // Predicated region
    $region22: #{tpu_custom_call.1} parent=1 // pred_check
      _
    $region23: #{tpu_custom_call.1} parent=1 // pred_check_branch
      %57 = sbr.rel (0) target = $region25
    $region24: #{tpu_custom_call.1} parent=1 // pred_region
      %s59 = ssub.s32 4096, 4096
      %60 = vsyncadd [#allocation9], %s59
      %s61 = sshll.u32 [#allocation8], 4
      %s62 = int_to_ptr.vmem [resolvable:$true] %s61
      %67 = dma.hbm_to_vmem [thread:$0]  %s5, 4096, %s62, [#allocation9], 128, 128, 8
    $region25: #{tpu_custom_call.1} parent=1 // pred_fallthru
      _
    // Predicated region
    $region26: #{tpu_custom_call.1} parent=1 // pred_check
      _
    $region27: #{tpu_custom_call.1} parent=1 // pred_check_branch
      %69 = sbr.rel (0) target = $region29
    $region28: #{tpu_custom_call.1} parent=1 // pred_region
      _
    $region29: #{tpu_custom_call.1} parent=1 // pred_fallthru
      _
    // Predicated region
    $region30: #{tpu_custom_call.1} parent=1 // pred_check
      _
    $region31: #{tpu_custom_call.1} parent=1 // pred_check_branch
      %71 = sbr.rel (0) target = $region33
    $region32: #{tpu_custom_call.1} parent=1 // pred_region
      %s73 = ssub.s32 2048, 2048
      %74 = vsyncadd [#allocation9], %s73
      %s75 = sshll.u32 [#allocation10], 4
      %s76 = int_to_ptr.vmem [resolvable:$true] %s75
      %81 = dma.hbm_to_vmem [thread:$0]  %s7, 2048, %s76, [#allocation9], 64, 64, 4
    $region33: #{tpu_custom_call.1} parent=1 // pred_fallthru
      _
    // Predicated region
    $region34: #{tpu_custom_call.1} parent=1 // pred_check
      _
    $region35: #{tpu_custom_call.1} parent=1 // pred_check_branch
      %83 = sbr.rel (0) target = $region37
    $region36: #{tpu_custom_call.1} parent=1 // pred_region
      _
    $region37: #{tpu_custom_call.1} parent=1 // pred_fallthru
      _
    // Predicated region
    $region38: #{tpu_custom_call.1} parent=1 // pred_check
      _
    $region39: #{tpu_custom_call.1} parent=1 // pred_check_branch
      %85 = sbr.rel (0) target = $region41
    $region40: #{tpu_custom_call.1} parent=1 // pred_region
      %86 = dma.done [#allocation3], 256
    $region41: #{tpu_custom_call.1} parent=1 // pred_fallthru
      _
    // Predicated region
    $region42: #{tpu_custom_call.1} parent=1 // pred_check
      _
    $region43: #{tpu_custom_call.1} parent=1 // pred_check_branch
      %88 = sbr.rel (0) target = $region45
    $region44: #{tpu_custom_call.1} parent=1 // pred_region
      %89 = dma.done [#allocation6], 24576
    $region45: #{tpu_custom_call.1} parent=1 // pred_fallthru
      _
    // Predicated region
    $region46: #{tpu_custom_call.1} parent=1 // pred_check
      _
    $region47: #{tpu_custom_call.1} parent=1 // pred_check_branch
      %91 = sbr.rel (0) target = $region49
    $region48: #{tpu_custom_call.1} parent=1 // pred_region
      %92 = dma.done [#allocation6], 6144
    $region49: #{tpu_custom_call.1} parent=1 // pred_fallthru
      _
    // Predicated region
    $region50: #{tpu_custom_call.1} parent=1 // pred_check
      _
    $region51: #{tpu_custom_call.1} parent=1 // pred_check_branch
      %94 = sbr.rel (0) target = $region53
    $region52: #{tpu_custom_call.1} parent=1 // pred_region
      %95 = dma.done [#allocation9], 4096
    $region53: #{tpu_custom_call.1} parent=1 // pred_fallthru
      _
    // Predicated region
    $region54: #{tpu_custom_call.1} parent=1 // pred_check
      _
    $region55: #{tpu_custom_call.1} parent=1 // pred_check_branch
      %97 = sbr.rel (0) target = $region57
    $region56: #{tpu_custom_call.1} parent=1 // pred_region
      %98 = dma.done [#allocation9], 2048
    $region57: #{tpu_custom_call.1} parent=1 // pred_fallthru
      _
    %v100 = vld [vmem:[#allocation2] sm:$0xff]
    %v101 = vld [vmem:[#allocation2 + $0x8] sm:$0xff]
    %v102 = vpack.c.bf16 %v100, %v100
    %v103 = vpack.c.bf16 %v101, %v101
    %v104 = vld [vmem:[#allocation5] sm:$0xff]
    %v105 = vld [vmem:[#allocation5 + $0x8] sm:$0xff]
    %v106 = vld [vmem:[#allocation5 + $0x10] sm:$0xff]
    %v107 = vld [vmem:[#allocation5 + $0x18] sm:$0xff]
    %v108 = vld [vmem:[#allocation5 + $0x20] sm:$0xff]
    %v109 = vld [vmem:[#allocation5 + $0x28] sm:$0xff]
    %v110 = vld [vmem:[#allocation5 + $0x30] sm:$0xff]
    %v111 = vld [vmem:[#allocation5 + $0x38] sm:$0xff]
    %v112 = vld [vmem:[#allocation5 + $0x40] sm:$0xff]
    %v113 = vld [vmem:[#allocation5 + $0x48] sm:$0xff]
    %v114 = vld [vmem:[#allocation5 + $0x50] sm:$0xff]
    %v115 = vld [vmem:[#allocation5 + $0x58] sm:$0xff]
    %v116 = vld [vmem:[#allocation5 + $0x60] sm:$0xff]
    %v117 = vld [vmem:[#allocation5 + $0x68] sm:$0xff]
    %v118 = vld [vmem:[#allocation5 + $0x70] sm:$0xff]
    %v119 = vld [vmem:[#allocation5 + $0x78] sm:$0xff]
    %v120 = vld [vmem:[#allocation5 + $0x80] sm:$0xff]
    %v121 = vld [vmem:[#allocation5 + $0x88] sm:$0xff]
    %v122 = vld [vmem:[#allocation5 + $0x90] sm:$0xff]
    %v123 = vld [vmem:[#allocation5 + $0x98] sm:$0xff]
    %v124 = vld [vmem:[#allocation5 + $0xa0] sm:$0xff]
    %v125 = vld [vmem:[#allocation5 + $0xa8] sm:$0xff]
    %v126 = vld [vmem:[#allocation5 + $0xb0] sm:$0xff]
    %v127 = vld [vmem:[#allocation5 + $0xb8] sm:$0xff]
    %v128 = vld [vmem:[#allocation5 + $0xc0] sm:$0xff]
    %v129 = vld [vmem:[#allocation5 + $0xc8] sm:$0xff]
    %v130 = vld [vmem:[#allocation5 + $0xd0] sm:$0xff]
    %v131 = vld [vmem:[#allocation5 + $0xd8] sm:$0xff]
    %v132 = vld [vmem:[#allocation5 + $0xe0] sm:$0xff]
    %v133 = vld [vmem:[#allocation5 + $0xe8] sm:$0xff]
    %v134 = vld [vmem:[#allocation5 + $0xf0] sm:$0xff]
    %v135 = vld [vmem:[#allocation5 + $0xf8] sm:$0xff]
    %v136 = vld [vmem:[#allocation5 + $0x100] sm:$0xff]
    %v137 = vld [vmem:[#allocation5 + $0x108] sm:$0xff]
    %v138 = vld [vmem:[#allocation5 + $0x110] sm:$0xff]
    %v139 = vld [vmem:[#allocation5 + $0x118] sm:$0xff]
    %v140 = vld [vmem:[#allocation5 + $0x120] sm:$0xff]
    %v141 = vld [vmem:[#allocation5 + $0x128] sm:$0xff]
    %v142 = vld [vmem:[#allocation5 + $0x130] sm:$0xff]
    %v143 = vld [vmem:[#allocation5 + $0x138] sm:$0xff]
    %v144 = vld [vmem:[#allocation5 + $0x140] sm:$0xff]
    %v145 = vld [vmem:[#allocation5 + $0x148] sm:$0xff]
    %v146 = vld [vmem:[#allocation5 + $0x150] sm:$0xff]
    %v147 = vld [vmem:[#allocation5 + $0x158] sm:$0xff]
    %v148 = vld [vmem:[#allocation5 + $0x160] sm:$0xff]
    %v149 = vld [vmem:[#allocation5 + $0x168] sm:$0xff]
    %v150 = vld [vmem:[#allocation5 + $0x170] sm:$0xff]
    %v151 = vld [vmem:[#allocation5 + $0x178] sm:$0xff]
    %v152 = vld [vmem:[#allocation5 + $0x180] sm:$0xff]
    %v153 = vld [vmem:[#allocation5 + $0x188] sm:$0xff]
    %v154 = vld [vmem:[#allocation5 + $0x190] sm:$0xff]
    %v155 = vld [vmem:[#allocation5 + $0x198] sm:$0xff]
    %v156 = vld [vmem:[#allocation5 + $0x1a0] sm:$0xff]
    %v157 = vld [vmem:[#allocation5 + $0x1a8] sm:$0xff]
    %v158 = vld [vmem:[#allocation5 + $0x1b0] sm:$0xff]
    %v159 = vld [vmem:[#allocation5 + $0x1b8] sm:$0xff]
    %v160 = vld [vmem:[#allocation5 + $0x1c0] sm:$0xff]
    %v161 = vld [vmem:[#allocation5 + $0x1c8] sm:$0xff]
    %v162 = vld [vmem:[#allocation5 + $0x1d0] sm:$0xff]
    %v163 = vld [vmem:[#allocation5 + $0x1d8] sm:$0xff]
    %v164 = vld [vmem:[#allocation5 + $0x1e0] sm:$0xff]
    %v165 = vld [vmem:[#allocation5 + $0x1e8] sm:$0xff]
    %v166 = vld [vmem:[#allocation5 + $0x1f0] sm:$0xff]
    %v167 = vld [vmem:[#allocation5 + $0x1f8] sm:$0xff]
    %v168 = vld [vmem:[#allocation5 + $0x200] sm:$0xff]
    %v169 = vld [vmem:[#allocation5 + $0x208] sm:$0xff]
    %v170 = vld [vmem:[#allocation5 + $0x210] sm:$0xff]
    %v171 = vld [vmem:[#allocation5 + $0x218] sm:$0xff]
    %v172 = vld [vmem:[#allocation5 + $0x220] sm:$0xff]
    %v173 = vld [vmem:[#allocation5 + $0x228] sm:$0xff]
    %v174 = vld [vmem:[#allocation5 + $0x230] sm:$0xff]
    %v175 = vld [vmem:[#allocation5 + $0x238] sm:$0xff]
    %v176 = vld [vmem:[#allocation5 + $0x240] sm:$0xff]
    %v177 = vld [vmem:[#allocation5 + $0x248] sm:$0xff]
    %v178 = vld [vmem:[#allocation5 + $0x250] sm:$0xff]
    %v179 = vld [vmem:[#allocation5 + $0x258] sm:$0xff]
    %v180 = vld [vmem:[#allocation5 + $0x260] sm:$0xff]
    %v181 = vld [vmem:[#allocation5 + $0x268] sm:$0xff]
    %v182 = vld [vmem:[#allocation5 + $0x270] sm:$0xff]
    %v183 = vld [vmem:[#allocation5 + $0x278] sm:$0xff]
    %v184 = vld [vmem:[#allocation5 + $0x280] sm:$0xff]
    %v185 = vld [vmem:[#allocation5 + $0x288] sm:$0xff]
    %v186 = vld [vmem:[#allocation5 + $0x290] sm:$0xff]
    %v187 = vld [vmem:[#allocation5 + $0x298] sm:$0xff]
    %v188 = vld [vmem:[#allocation5 + $0x2a0] sm:$0xff]
    %v189 = vld [vmem:[#allocation5 + $0x2a8] sm:$0xff]
    %v190 = vld [vmem:[#allocation5 + $0x2b0] sm:$0xff]
    %v191 = vld [vmem:[#allocation5 + $0x2b8] sm:$0xff]
    %v192 = vld [vmem:[#allocation5 + $0x2c0] sm:$0xff]
    %v193 = vld [vmem:[#allocation5 + $0x2c8] sm:$0xff]
    %v194 = vld [vmem:[#allocation5 + $0x2d0] sm:$0xff]
    %v195 = vld [vmem:[#allocation5 + $0x2d8] sm:$0xff]
    %v196 = vld [vmem:[#allocation5 + $0x2e0] sm:$0xff]
    %v197 = vld [vmem:[#allocation5 + $0x2e8] sm:$0xff]
    %v198 = vld [vmem:[#allocation5 + $0x2f0] sm:$0xff]
    %v199 = vld [vmem:[#allocation5 + $0x2f8] sm:$0xff]
    %v200 = vld [vmem:[#allocation5 + $0x300] sm:$0xff]
    %v201 = vld [vmem:[#allocation5 + $0x308] sm:$0xff]
    %v202 = vld [vmem:[#allocation5 + $0x310] sm:$0xff]
    %v203 = vld [vmem:[#allocation5 + $0x318] sm:$0xff]
    %v204 = vld [vmem:[#allocation5 + $0x320] sm:$0xff]
    %v205 = vld [vmem:[#allocation5 + $0x328] sm:$0xff]
    %v206 = vld [vmem:[#allocation5 + $0x330] sm:$0xff]
    %v207 = vld [vmem:[#allocation5 + $0x338] sm:$0xff]
    %v208 = vld [vmem:[#allocation5 + $0x340] sm:$0xff]
    %v209 = vld [vmem:[#allocation5 + $0x348] sm:$0xff]
    %v210 = vld [vmem:[#allocation5 + $0x350] sm:$0xff]
    %v211 = vld [vmem:[#allocation5 + $0x358] sm:$0xff]
    %v212 = vld [vmem:[#allocation5 + $0x360] sm:$0xff]
    %v213 = vld [vmem:[#allocation5 + $0x368] sm:$0xff]
    %v214 = vld [vmem:[#allocation5 + $0x370] sm:$0xff]
    %v215 = vld [vmem:[#allocation5 + $0x378] sm:$0xff]
    %v216 = vld [vmem:[#allocation5 + $0x380] sm:$0xff]
    %v217 = vld [vmem:[#allocation5 + $0x388] sm:$0xff]
    %v218 = vld [vmem:[#allocation5 + $0x390] sm:$0xff]
    %v219 = vld [vmem:[#allocation5 + $0x398] sm:$0xff]
    %v220 = vld [vmem:[#allocation5 + $0x3a0] sm:$0xff]
    %v221 = vld [vmem:[#allocation5 + $0x3a8] sm:$0xff]
    %v222 = vld [vmem:[#allocation5 + $0x3b0] sm:$0xff]
    %v223 = vld [vmem:[#allocation5 + $0x3b8] sm:$0xff]
    %v224 = vld [vmem:[#allocation5 + $0x3c0] sm:$0xff]
    %v225 = vld [vmem:[#allocation5 + $0x3c8] sm:$0xff]
    %v226 = vld [vmem:[#allocation5 + $0x3d0] sm:$0xff]
    %v227 = vld [vmem:[#allocation5 + $0x3d8] sm:$0xff]
    %v228 = vld [vmem:[#allocation5 + $0x3e0] sm:$0xff]
    %v229 = vld [vmem:[#allocation5 + $0x3e8] sm:$0xff]
    %v230 = vld [vmem:[#allocation5 + $0x3f0] sm:$0xff]
    %v231 = vld [vmem:[#allocation5 + $0x3f8] sm:$0xff]
    %v232 = vld [vmem:[#allocation5 + $0x400] sm:$0xff]
    %v233 = vld [vmem:[#allocation5 + $0x408] sm:$0xff]
    %v234 = vld [vmem:[#allocation5 + $0x410] sm:$0xff]
    %v235 = vld [vmem:[#allocation5 + $0x418] sm:$0xff]
    %v236 = vld [vmem:[#allocation5 + $0x420] sm:$0xff]
    %v237 = vld [vmem:[#allocation5 + $0x428] sm:$0xff]
    %v238 = vld [vmem:[#allocation5 + $0x430] sm:$0xff]
    %v239 = vld [vmem:[#allocation5 + $0x438] sm:$0xff]
    %v240 = vld [vmem:[#allocation5 + $0x440] sm:$0xff]
    %v241 = vld [vmem:[#allocation5 + $0x448] sm:$0xff]
    %v242 = vld [vmem:[#allocation5 + $0x450] sm:$0xff]
    %v243 = vld [vmem:[#allocation5 + $0x458] sm:$0xff]
    %v244 = vld [vmem:[#allocation5 + $0x460] sm:$0xff]
    %v245 = vld [vmem:[#allocation5 + $0x468] sm:$0xff]
    %v246 = vld [vmem:[#allocation5 + $0x470] sm:$0xff]
    %v247 = vld [vmem:[#allocation5 + $0x478] sm:$0xff]
    %v248 = vld [vmem:[#allocation5 + $0x480] sm:$0xff]
    %v249 = vld [vmem:[#allocation5 + $0x488] sm:$0xff]
    %v250 = vld [vmem:[#allocation5 + $0x490] sm:$0xff]
    %v251 = vld [vmem:[#allocation5 + $0x498] sm:$0xff]
    %v252 = vld [vmem:[#allocation5 + $0x4a0] sm:$0xff]
    %v253 = vld [vmem:[#allocation5 + $0x4a8] sm:$0xff]
    %v254 = vld [vmem:[#allocation5 + $0x4b0] sm:$0xff]
    %v255 = vld [vmem:[#allocation5 + $0x4b8] sm:$0xff]
    %v256 = vld [vmem:[#allocation5 + $0x4c0] sm:$0xff]
    %v257 = vld [vmem:[#allocation5 + $0x4c8] sm:$0xff]
    %v258 = vld [vmem:[#allocation5 + $0x4d0] sm:$0xff]
    %v259 = vld [vmem:[#allocation5 + $0x4d8] sm:$0xff]
    %v260 = vld [vmem:[#allocation5 + $0x4e0] sm:$0xff]
    %v261 = vld [vmem:[#allocation5 + $0x4e8] sm:$0xff]
    %v262 = vld [vmem:[#allocation5 + $0x4f0] sm:$0xff]
    %v263 = vld [vmem:[#allocation5 + $0x4f8] sm:$0xff]
    %v264 = vld [vmem:[#allocation5 + $0x500] sm:$0xff]
    %v265 = vld [vmem:[#allocation5 + $0x508] sm:$0xff]
    %v266 = vld [vmem:[#allocation5 + $0x510] sm:$0xff]
    %v267 = vld [vmem:[#allocation5 + $0x518] sm:$0xff]
    %v268 = vld [vmem:[#allocation5 + $0x520] sm:$0xff]
    %v269 = vld [vmem:[#allocation5 + $0x528] sm:$0xff]
    %v270 = vld [vmem:[#allocation5 + $0x530] sm:$0xff]
    %v271 = vld [vmem:[#allocation5 + $0x538] sm:$0xff]
    %v272 = vld [vmem:[#allocation5 + $0x540] sm:$0xff]
    %v273 = vld [vmem:[#allocation5 + $0x548] sm:$0xff]
    %v274 = vld [vmem:[#allocation5 + $0x550] sm:$0xff]
    %v275 = vld [vmem:[#allocation5 + $0x558] sm:$0xff]
    %v276 = vld [vmem:[#allocation5 + $0x560] sm:$0xff]
    %v277 = vld [vmem:[#allocation5 + $0x568] sm:$0xff]
    %v278 = vld [vmem:[#allocation5 + $0x570] sm:$0xff]
    %v279 = vld [vmem:[#allocation5 + $0x578] sm:$0xff]
    %v280 = vld [vmem:[#allocation5 + $0x580] sm:$0xff]
    %v281 = vld [vmem:[#allocation5 + $0x588] sm:$0xff]
    %v282 = vld [vmem:[#allocation5 + $0x590] sm:$0xff]
    %v283 = vld [vmem:[#allocation5 + $0x598] sm:$0xff]
    %v284 = vld [vmem:[#allocation5 + $0x5a0] sm:$0xff]
    %v285 = vld [vmem:[#allocation5 + $0x5a8] sm:$0xff]
    %v286 = vld [vmem:[#allocation5 + $0x5b0] sm:$0xff]
    %v287 = vld [vmem:[#allocation5 + $0x5b8] sm:$0xff]
    %v288 = vld [vmem:[#allocation5 + $0x5c0] sm:$0xff]
    %v289 = vld [vmem:[#allocation5 + $0x5c8] sm:$0xff]
    %v290 = vld [vmem:[#allocation5 + $0x5d0] sm:$0xff]
    %v291 = vld [vmem:[#allocation5 + $0x5d8] sm:$0xff]
    %v292 = vld [vmem:[#allocation5 + $0x5e0] sm:$0xff]
    %v293 = vld [vmem:[#allocation5 + $0x5e8] sm:$0xff]
    %v294 = vld [vmem:[#allocation5 + $0x5f0] sm:$0xff]
    %v295 = vld [vmem:[#allocation5 + $0x5f8] sm:$0xff]
    %v488 = vunpack.c.l.b16 %v104
    %v489 = vunpack.c.h.b16 %v104
    %v490 = vunpack.c.l.b16 %v105
    %v491 = vunpack.c.h.b16 %v105
    %v492 = vunpack.c.l.b16 %v106
    %v493 = vunpack.c.h.b16 %v106
    %v494 = vunpack.c.l.b16 %v107
    %v495 = vunpack.c.h.b16 %v107
    %v496 = vunpack.c.l.b16 %v108
    %v497 = vunpack.c.h.b16 %v108
    %v498 = vunpack.c.l.b16 %v109
    %v499 = vunpack.c.h.b16 %v109
    %v500 = vunpack.c.l.b16 %v110
    %v501 = vunpack.c.h.b16 %v110
    %v502 = vunpack.c.l.b16 %v111
    %v503 = vunpack.c.h.b16 %v111
    %v504 = vunpack.c.l.b16 %v112
    %v505 = vunpack.c.h.b16 %v112
    %v506 = vunpack.c.l.b16 %v113
    %v507 = vunpack.c.h.b16 %v113
    %v508 = vunpack.c.l.b16 %v114
    %v509 = vunpack.c.h.b16 %v114
    %v510 = vunpack.c.l.b16 %v115
    %v511 = vunpack.c.h.b16 %v115
    %v512 = vunpack.c.l.b16 %v116
    %v513 = vunpack.c.h.b16 %v116
    %v514 = vunpack.c.l.b16 %v117
    %v515 = vunpack.c.h.b16 %v117
    %v516 = vunpack.c.l.b16 %v118
    %v517 = vunpack.c.h.b16 %v118
    %v518 = vunpack.c.l.b16 %v119
    %v519 = vunpack.c.h.b16 %v119
    %v520 = vunpack.c.l.b16 %v120
    %v521 = vunpack.c.h.b16 %v120
    %v522 = vunpack.c.l.b16 %v121
    %v523 = vunpack.c.h.b16 %v121
    %v524 = vunpack.c.l.b16 %v122
    %v525 = vunpack.c.h.b16 %v122
    %v526 = vunpack.c.l.b16 %v123
    %v527 = vunpack.c.h.b16 %v123
    %v528 = vunpack.c.l.b16 %v124
    %v529 = vunpack.c.h.b16 %v124
    %v530 = vunpack.c.l.b16 %v125
    %v531 = vunpack.c.h.b16 %v125
    %v532 = vunpack.c.l.b16 %v126
    %v533 = vunpack.c.h.b16 %v126
    %v534 = vunpack.c.l.b16 %v127
    %v535 = vunpack.c.h.b16 %v127
    %v536 = vunpack.c.l.b16 %v128
    %v537 = vunpack.c.h.b16 %v128
    %v538 = vunpack.c.l.b16 %v129
    %v539 = vunpack.c.h.b16 %v129
    %v540 = vunpack.c.l.b16 %v130
    %v541 = vunpack.c.h.b16 %v130
    %v542 = vunpack.c.l.b16 %v131
    %v543 = vunpack.c.h.b16 %v131
    %v544 = vunpack.c.l.b16 %v132
    %v545 = vunpack.c.h.b16 %v132
    %v546 = vunpack.c.l.b16 %v133
    %v547 = vunpack.c.h.b16 %v133
    %v548 = vunpack.c.l.b16 %v134
    %v549 = vunpack.c.h.b16 %v134
    %v550 = vunpack.c.l.b16 %v135
    %v551 = vunpack.c.h.b16 %v135
    %v552 = vunpack.c.l.b16 %v136
    %v553 = vunpack.c.h.b16 %v136
    %v554 = vunpack.c.l.b16 %v137
    %v555 = vunpack.c.h.b16 %v137
    %v556 = vunpack.c.l.b16 %v138
    %v557 = vunpack.c.h.b16 %v138
    %v558 = vunpack.c.l.b16 %v139
    %v559 = vunpack.c.h.b16 %v139
    %v560 = vunpack.c.l.b16 %v140
    %v561 = vunpack.c.h.b16 %v140
    %v562 = vunpack.c.l.b16 %v141
    %v563 = vunpack.c.h.b16 %v141
    %v564 = vunpack.c.l.b16 %v142
    %v565 = vunpack.c.h.b16 %v142
    %v566 = vunpack.c.l.b16 %v143
    %v567 = vunpack.c.h.b16 %v143
    %v568 = vunpack.c.l.b16 %v144
    %v569 = vunpack.c.h.b16 %v144
    %v570 = vunpack.c.l.b16 %v145
    %v571 = vunpack.c.h.b16 %v145
    %v572 = vunpack.c.l.b16 %v146
    %v573 = vunpack.c.h.b16 %v146
    %v574 = vunpack.c.l.b16 %v147
    %v575 = vunpack.c.h.b16 %v147
    %v576 = vunpack.c.l.b16 %v148
    %v577 = vunpack.c.h.b16 %v148
    %v578 = vunpack.c.l.b16 %v149
    %v579 = vunpack.c.h.b16 %v149
    %v580 = vunpack.c.l.b16 %v150
    %v581 = vunpack.c.h.b16 %v150
    %v582 = vunpack.c.l.b16 %v151
    %v583 = vunpack.c.h.b16 %v151
    %v584 = vunpack.c.l.b16 %v152
    %v585 = vunpack.c.h.b16 %v152
    %v586 = vunpack.c.l.b16 %v153
    %v587 = vunpack.c.h.b16 %v153
    %v588 = vunpack.c.l.b16 %v154
    %v589 = vunpack.c.h.b16 %v154
    %v590 = vunpack.c.l.b16 %v155
    %v591 = vunpack.c.h.b16 %v155
    %v592 = vunpack.c.l.b16 %v156
    %v593 = vunpack.c.h.b16 %v156
    %v594 = vunpack.c.l.b16 %v157
    %v595 = vunpack.c.h.b16 %v157
    %v596 = vunpack.c.l.b16 %v158
    %v597 = vunpack.c.h.b16 %v158
    %v598 = vunpack.c.l.b16 %v159
    %v599 = vunpack.c.h.b16 %v159
    %v600 = vunpack.c.l.b16 %v160
    %v601 = vunpack.c.h.b16 %v160
    %v602 = vunpack.c.l.b16 %v161
    %v603 = vunpack.c.h.b16 %v161
    %v604 = vunpack.c.l.b16 %v162
    %v605 = vunpack.c.h.b16 %v162
    %v606 = vunpack.c.l.b16 %v163
    %v607 = vunpack.c.h.b16 %v163
    %v608 = vunpack.c.l.b16 %v164
    %v609 = vunpack.c.h.b16 %v164
    %v610 = vunpack.c.l.b16 %v165
    %v611 = vunpack.c.h.b16 %v165
    %v612 = vunpack.c.l.b16 %v166
    %v613 = vunpack.c.h.b16 %v166
    %v614 = vunpack.c.l.b16 %v167
    %v615 = vunpack.c.h.b16 %v167
    %v616 = vunpack.c.l.b16 %v168
    %v617 = vunpack.c.h.b16 %v168
    %v618 = vunpack.c.l.b16 %v169
    %v619 = vunpack.c.h.b16 %v169
    %v620 = vunpack.c.l.b16 %v170
    %v621 = vunpack.c.h.b16 %v170
    %v622 = vunpack.c.l.b16 %v171
    %v623 = vunpack.c.h.b16 %v171
    %v624 = vunpack.c.l.b16 %v172
    %v625 = vunpack.c.h.b16 %v172
    %v626 = vunpack.c.l.b16 %v173
    %v627 = vunpack.c.h.b16 %v173
    %v628 = vunpack.c.l.b16 %v174
    %v629 = vunpack.c.h.b16 %v174
    %v630 = vunpack.c.l.b16 %v175
    %v631 = vunpack.c.h.b16 %v175
    %v632 = vunpack.c.l.b16 %v176
    %v633 = vunpack.c.h.b16 %v176
    %v634 = vunpack.c.l.b16 %v177
    %v635 = vunpack.c.h.b16 %v177
    %v636 = vunpack.c.l.b16 %v178
    %v637 = vunpack.c.h.b16 %v178
    %v638 = vunpack.c.l.b16 %v179
    %v639 = vunpack.c.h.b16 %v179
    %v640 = vunpack.c.l.b16 %v180
    %v641 = vunpack.c.h.b16 %v180
    %v642 = vunpack.c.l.b16 %v181
    %v643 = vunpack.c.h.b16 %v181
    %v644 = vunpack.c.l.b16 %v182
    %v645 = vunpack.c.h.b16 %v182
    %v646 = vunpack.c.l.b16 %v183
    %v647 = vunpack.c.h.b16 %v183
    %v648 = vunpack.c.l.b16 %v184
    %v649 = vunpack.c.h.b16 %v184
    %v650 = vunpack.c.l.b16 %v185
    %v651 = vunpack.c.h.b16 %v185
    %v652 = vunpack.c.l.b16 %v186
    %v653 = vunpack.c.h.b16 %v186
    %v654 = vunpack.c.l.b16 %v187
    %v655 = vunpack.c.h.b16 %v187
    %v656 = vunpack.c.l.b16 %v188
    %v657 = vunpack.c.h.b16 %v188
    %v658 = vunpack.c.l.b16 %v189
    %v659 = vunpack.c.h.b16 %v189
    %v660 = vunpack.c.l.b16 %v190
    %v661 = vunpack.c.h.b16 %v190
    %v662 = vunpack.c.l.b16 %v191
    %v663 = vunpack.c.h.b16 %v191
    %v664 = vunpack.c.l.b16 %v192
    %v665 = vunpack.c.h.b16 %v192
    %v666 = vunpack.c.l.b16 %v193
    %v667 = vunpack.c.h.b16 %v193
    %v668 = vunpack.c.l.b16 %v194
    %v669 = vunpack.c.h.b16 %v194
    %v670 = vunpack.c.l.b16 %v195
    %v671 = vunpack.c.h.b16 %v195
    %v672 = vunpack.c.l.b16 %v196
    %v673 = vunpack.c.h.b16 %v196
    %v674 = vunpack.c.l.b16 %v197
    %v675 = vunpack.c.h.b16 %v197
    %v676 = vunpack.c.l.b16 %v198
    %v677 = vunpack.c.h.b16 %v198
    %v678 = vunpack.c.l.b16 %v199
    %v679 = vunpack.c.h.b16 %v199
    %v680 = vunpack.c.l.b16 %v200
    %v681 = vunpack.c.h.b16 %v200
    %v682 = vunpack.c.l.b16 %v201
    %v683 = vunpack.c.h.b16 %v201
    %v684 = vunpack.c.l.b16 %v202
    %v685 = vunpack.c.h.b16 %v202
    %v686 = vunpack.c.l.b16 %v203
    %v687 = vunpack.c.h.b16 %v203
    %v688 = vunpack.c.l.b16 %v204
    %v689 = vunpack.c.h.b16 %v204
    %v690 = vunpack.c.l.b16 %v205
    %v691 = vunpack.c.h.b16 %v205
    %v692 = vunpack.c.l.b16 %v206
    %v693 = vunpack.c.h.b16 %v206
    %v694 = vunpack.c.l.b16 %v207
    %v695 = vunpack.c.h.b16 %v207
    %v696 = vunpack.c.l.b16 %v208
    %v697 = vunpack.c.h.b16 %v208
    %v698 = vunpack.c.l.b16 %v209
    %v699 = vunpack.c.h.b16 %v209
    %v700 = vunpack.c.l.b16 %v210
    %v701 = vunpack.c.h.b16 %v210
    %v702 = vunpack.c.l.b16 %v211
    %v703 = vunpack.c.h.b16 %v211
    %v704 = vunpack.c.l.b16 %v212
    %v705 = vunpack.c.h.b16 %v212
    %v706 = vunpack.c.l.b16 %v213
    %v707 = vunpack.c.h.b16 %v213
    %v708 = vunpack.c.l.b16 %v214
    %v709 = vunpack.c.h.b16 %v214
    %v710 = vunpack.c.l.b16 %v215
    %v711 = vunpack.c.h.b16 %v215
    %v712 = vunpack.c.l.b16 %v216
    %v713 = vunpack.c.h.b16 %v216
    %v714 = vunpack.c.l.b16 %v217
    %v715 = vunpack.c.h.b16 %v217
    %v716 = vunpack.c.l.b16 %v218
    %v717 = vunpack.c.h.b16 %v218
    %v718 = vunpack.c.l.b16 %v219
    %v719 = vunpack.c.h.b16 %v219
    %v720 = vunpack.c.l.b16 %v220
    %v721 = vunpack.c.h.b16 %v220
    %v722 = vunpack.c.l.b16 %v221
    %v723 = vunpack.c.h.b16 %v221
    %v724 = vunpack.c.l.b16 %v222
    %v725 = vunpack.c.h.b16 %v222
    %v726 = vunpack.c.l.b16 %v223
    %v727 = vunpack.c.h.b16 %v223
    %v728 = vunpack.c.l.b16 %v224
    %v729 = vunpack.c.h.b16 %v224
    %v730 = vunpack.c.l.b16 %v225
    %v731 = vunpack.c.h.b16 %v225
    %v732 = vunpack.c.l.b16 %v226
    %v733 = vunpack.c.h.b16 %v226
    %v734 = vunpack.c.l.b16 %v227
    %v735 = vunpack.c.h.b16 %v227
    %v736 = vunpack.c.l.b16 %v228
    %v737 = vunpack.c.h.b16 %v228
    %v738 = vunpack.c.l.b16 %v229
    %v739 = vunpack.c.h.b16 %v229
    %v740 = vunpack.c.l.b16 %v230
    %v741 = vunpack.c.h.b16 %v230
    %v742 = vunpack.c.l.b16 %v231
    %v743 = vunpack.c.h.b16 %v231
    %v744 = vunpack.c.l.b16 %v232
    %v745 = vunpack.c.h.b16 %v232
    %v746 = vunpack.c.l.b16 %v233
    %v747 = vunpack.c.h.b16 %v233
    %v748 = vunpack.c.l.b16 %v234
    %v749 = vunpack.c.h.b16 %v234
    %v750 = vunpack.c.l.b16 %v235
    %v751 = vunpack.c.h.b16 %v235
    %v752 = vunpack.c.l.b16 %v236
    %v753 = vunpack.c.h.b16 %v236
    %v754 = vunpack.c.l.b16 %v237
    %v755 = vunpack.c.h.b16 %v237
    %v756 = vunpack.c.l.b16 %v238
    %v757 = vunpack.c.h.b16 %v238
    %v758 = vunpack.c.l.b16 %v239
    %v759 = vunpack.c.h.b16 %v239
    %v760 = vunpack.c.l.b16 %v240
    %v761 = vunpack.c.h.b16 %v240
    %v762 = vunpack.c.l.b16 %v241
    %v763 = vunpack.c.h.b16 %v241
    %v764 = vunpack.c.l.b16 %v242
    %v765 = vunpack.c.h.b16 %v242
    %v766 = vunpack.c.l.b16 %v243
    %v767 = vunpack.c.h.b16 %v243
    %v768 = vunpack.c.l.b16 %v244
    %v769 = vunpack.c.h.b16 %v244
    %v770 = vunpack.c.l.b16 %v245
    %v771 = vunpack.c.h.b16 %v245
    %v772 = vunpack.c.l.b16 %v246
    %v773 = vunpack.c.h.b16 %v246
    %v774 = vunpack.c.l.b16 %v247
    %v775 = vunpack.c.h.b16 %v247
    %v776 = vunpack.c.l.b16 %v248
    %v777 = vunpack.c.h.b16 %v248
    %v778 = vunpack.c.l.b16 %v249
    %v779 = vunpack.c.h.b16 %v249
    %v780 = vunpack.c.l.b16 %v250
    %v781 = vunpack.c.h.b16 %v250
    %v782 = vunpack.c.l.b16 %v251
    %v783 = vunpack.c.h.b16 %v251
    %v784 = vunpack.c.l.b16 %v252
    %v785 = vunpack.c.h.b16 %v252
    %v786 = vunpack.c.l.b16 %v253
    %v787 = vunpack.c.h.b16 %v253
    %v788 = vunpack.c.l.b16 %v254
    %v789 = vunpack.c.h.b16 %v254
    %v790 = vunpack.c.l.b16 %v255
    %v791 = vunpack.c.h.b16 %v255
    %v792 = vunpack.c.l.b16 %v256
    %v793 = vunpack.c.h.b16 %v256
    %v794 = vunpack.c.l.b16 %v257
    %v795 = vunpack.c.h.b16 %v257
    %v796 = vunpack.c.l.b16 %v258
    %v797 = vunpack.c.h.b16 %v258
    %v798 = vunpack.c.l.b16 %v259
    %v799 = vunpack.c.h.b16 %v259
    %v800 = vunpack.c.l.b16 %v260
    %v801 = vunpack.c.h.b16 %v260
    %v802 = vunpack.c.l.b16 %v261
    %v803 = vunpack.c.h.b16 %v261
    %v804 = vunpack.c.l.b16 %v262
    %v805 = vunpack.c.h.b16 %v262
    %v806 = vunpack.c.l.b16 %v263
    %v807 = vunpack.c.h.b16 %v263
    %v808 = vunpack.c.l.b16 %v264
    %v809 = vunpack.c.h.b16 %v264
    %v810 = vunpack.c.l.b16 %v265
    %v811 = vunpack.c.h.b16 %v265
    %v812 = vunpack.c.l.b16 %v266
    %v813 = vunpack.c.h.b16 %v266
    %v814 = vunpack.c.l.b16 %v267
    %v815 = vunpack.c.h.b16 %v267
    %v816 = vunpack.c.l.b16 %v268
    %v817 = vunpack.c.h.b16 %v268
    %v818 = vunpack.c.l.b16 %v269
    %v819 = vunpack.c.h.b16 %v269
    %v820 = vunpack.c.l.b16 %v270
    %v821 = vunpack.c.h.b16 %v270
    %v822 = vunpack.c.l.b16 %v271
    %v823 = vunpack.c.h.b16 %v271
    %v824 = vunpack.c.l.b16 %v272
    %v825 = vunpack.c.h.b16 %v272
    %v826 = vunpack.c.l.b16 %v273
    %v827 = vunpack.c.h.b16 %v273
    %v828 = vunpack.c.l.b16 %v274
    %v829 = vunpack.c.h.b16 %v274
    %v830 = vunpack.c.l.b16 %v275
    %v831 = vunpack.c.h.b16 %v275
    %v832 = vunpack.c.l.b16 %v276
    %v833 = vunpack.c.h.b16 %v276
    %v834 = vunpack.c.l.b16 %v277
    %v835 = vunpack.c.h.b16 %v277
    %v836 = vunpack.c.l.b16 %v278
    %v837 = vunpack.c.h.b16 %v278
    %v838 = vunpack.c.l.b16 %v279
    %v839 = vunpack.c.h.b16 %v279
    %v840 = vunpack.c.l.b16 %v280
    %v841 = vunpack.c.h.b16 %v280
    %v842 = vunpack.c.l.b16 %v281
    %v843 = vunpack.c.h.b16 %v281
    %v844 = vunpack.c.l.b16 %v282
    %v845 = vunpack.c.h.b16 %v282
    %v846 = vunpack.c.l.b16 %v283
    %v847 = vunpack.c.h.b16 %v283
    %v848 = vunpack.c.l.b16 %v284
    %v849 = vunpack.c.h.b16 %v284
    %v850 = vunpack.c.l.b16 %v285
    %v851 = vunpack.c.h.b16 %v285
    %v852 = vunpack.c.l.b16 %v286
    %v853 = vunpack.c.h.b16 %v286
    %v854 = vunpack.c.l.b16 %v287
    %v855 = vunpack.c.h.b16 %v287
    %v856 = vunpack.c.l.b16 %v288
    %v857 = vunpack.c.h.b16 %v288
    %v858 = vunpack.c.l.b16 %v289
    %v859 = vunpack.c.h.b16 %v289
    %v860 = vunpack.c.l.b16 %v290
    %v861 = vunpack.c.h.b16 %v290
    %v862 = vunpack.c.l.b16 %v291
    %v863 = vunpack.c.h.b16 %v291
    %v864 = vunpack.c.l.b16 %v292
    %v865 = vunpack.c.h.b16 %v292
    %v866 = vunpack.c.l.b16 %v293
    %v867 = vunpack.c.h.b16 %v293
    %v868 = vunpack.c.l.b16 %v294
    %v869 = vunpack.c.h.b16 %v294
    %v870 = vunpack.c.l.b16 %v295
    %v871 = vunpack.c.h.b16 %v295
    %v872 = vpack.c.b16 %v500, %v488
    %v873 = vpack.c.b16 %v501, %v489
    %v874 = vpack.c.b16 %v502, %v490
    %v875 = vpack.c.b16 %v503, %v491
    %v876 = vpack.c.b16 %v504, %v492
    %v877 = vpack.c.b16 %v505, %v493
    %v878 = vpack.c.b16 %v506, %v494
    %v879 = vpack.c.b16 %v507, %v495
    %v880 = vpack.c.b16 %v508, %v496
    %v881 = vpack.c.b16 %v509, %v497
    %v882 = vpack.c.b16 %v510, %v498
    %v883 = vpack.c.b16 %v511, %v499
    %v884 = vpack.c.b16 %v524, %v512
    %v885 = vpack.c.b16 %v525, %v513
    %v886 = vpack.c.b16 %v526, %v514
    %v887 = vpack.c.b16 %v527, %v515
    %v888 = vpack.c.b16 %v528, %v516
    %v889 = vpack.c.b16 %v529, %v517
    %v890 = vpack.c.b16 %v530, %v518
    %v891 = vpack.c.b16 %v531, %v519
    %v892 = vpack.c.b16 %v532, %v520
    %v893 = vpack.c.b16 %v533, %v521
    %v894 = vpack.c.b16 %v534, %v522
    %v895 = vpack.c.b16 %v535, %v523
    %v896 = vpack.c.b16 %v548, %v536
    %v897 = vpack.c.b16 %v549, %v537
    %v898 = vpack.c.b16 %v550, %v538
    %v899 = vpack.c.b16 %v551, %v539
    %v900 = vpack.c.b16 %v552, %v540
    %v901 = vpack.c.b16 %v553, %v541
    %v902 = vpack.c.b16 %v554, %v542
    %v903 = vpack.c.b16 %v555, %v543
    %v904 = vpack.c.b16 %v556, %v544
    %v905 = vpack.c.b16 %v557, %v545
    %v906 = vpack.c.b16 %v558, %v546
    %v907 = vpack.c.b16 %v559, %v547
    %v908 = vpack.c.b16 %v572, %v560
    %v909 = vpack.c.b16 %v573, %v561
    %v910 = vpack.c.b16 %v574, %v562
    %v911 = vpack.c.b16 %v575, %v563
    %v912 = vpack.c.b16 %v576, %v564
    %v913 = vpack.c.b16 %v577, %v565
    %v914 = vpack.c.b16 %v578, %v566
    %v915 = vpack.c.b16 %v579, %v567
    %v916 = vpack.c.b16 %v580, %v568
    %v917 = vpack.c.b16 %v581, %v569
    %v918 = vpack.c.b16 %v582, %v570
    %v919 = vpack.c.b16 %v583, %v571
    %v920 = vpack.c.b16 %v596, %v584
    %v921 = vpack.c.b16 %v597, %v585
    %v922 = vpack.c.b16 %v598, %v586
    %v923 = vpack.c.b16 %v599, %v587
    %v924 = vpack.c.b16 %v600, %v588
    %v925 = vpack.c.b16 %v601, %v589
    %v926 = vpack.c.b16 %v602, %v590
    %v927 = vpack.c.b16 %v603, %v591
    %v928 = vpack.c.b16 %v604, %v592
    %v929 = vpack.c.b16 %v605, %v593
    %v930 = vpack.c.b16 %v606, %v594
    %v931 = vpack.c.b16 %v607, %v595
    %v932 = vpack.c.b16 %v620, %v608
    %v933 = vpack.c.b16 %v621, %v609
    %v934 = vpack.c.b16 %v622, %v610
    %v935 = vpack.c.b16 %v623, %v611
    %v936 = vpack.c.b16 %v624, %v612
    %v937 = vpack.c.b16 %v625, %v613
    %v938 = vpack.c.b16 %v626, %v614
    %v939 = vpack.c.b16 %v627, %v615
    %v940 = vpack.c.b16 %v628, %v616
    %v941 = vpack.c.b16 %v629, %v617
    %v942 = vpack.c.b16 %v630, %v618
    %v943 = vpack.c.b16 %v631, %v619
    %v944 = vpack.c.b16 %v644, %v632
    %v945 = vpack.c.b16 %v645, %v633
    %v946 = vpack.c.b16 %v646, %v634
    %v947 = vpack.c.b16 %v647, %v635
    %v948 = vpack.c.b16 %v648, %v636
    %v949 = vpack.c.b16 %v649, %v637
    %v950 = vpack.c.b16 %v650, %v638
    %v951 = vpack.c.b16 %v651, %v639
    %v952 = vpack.c.b16 %v652, %v640
    %v953 = vpack.c.b16 %v653, %v641
    %v954 = vpack.c.b16 %v654, %v642
    %v955 = vpack.c.b16 %v655, %v643
    %v956 = vpack.c.b16 %v668, %v656
    %v957 = vpack.c.b16 %v669, %v657
    %v958 = vpack.c.b16 %v670, %v658
    %v959 = vpack.c.b16 %v671, %v659
    %v960 = vpack.c.b16 %v672, %v660
    %v961 = vpack.c.b16 %v673, %v661
    %v962 = vpack.c.b16 %v674, %v662
    %v963 = vpack.c.b16 %v675, %v663
    %v964 = vpack.c.b16 %v676, %v664
    %v965 = vpack.c.b16 %v677, %v665
    %v966 = vpack.c.b16 %v678, %v666
    %v967 = vpack.c.b16 %v679, %v667
    %v968 = vpack.c.b16 %v692, %v680
    %v969 = vpack.c.b16 %v693, %v681
    %v970 = vpack.c.b16 %v694, %v682
    %v971 = vpack.c.b16 %v695, %v683
    %v972 = vpack.c.b16 %v696, %v684
    %v973 = vpack.c.b16 %v697, %v685
    %v974 = vpack.c.b16 %v698, %v686
    %v975 = vpack.c.b16 %v699, %v687
    %v976 = vpack.c.b16 %v700, %v688
    %v977 = vpack.c.b16 %v701, %v689
    %v978 = vpack.c.b16 %v702, %v690
    %v979 = vpack.c.b16 %v703, %v691
    %v980 = vpack.c.b16 %v716, %v704
    %v981 = vpack.c.b16 %v717, %v705
    %v982 = vpack.c.b16 %v718, %v706
    %v983 = vpack.c.b16 %v719, %v707
    %v984 = vpack.c.b16 %v720, %v708
    %v985 = vpack.c.b16 %v721, %v709
    %v986 = vpack.c.b16 %v722, %v710
    %v987 = vpack.c.b16 %v723, %v711
    %v988 = vpack.c.b16 %v724, %v712
    %v989 = vpack.c.b16 %v725, %v713
    %v990 = vpack.c.b16 %v726, %v714
    %v991 = vpack.c.b16 %v727, %v715
    %v992 = vpack.c.b16 %v740, %v728
    %v993 = vpack.c.b16 %v741, %v729
    %v994 = vpack.c.b16 %v742, %v730
    %v995 = vpack.c.b16 %v743, %v731
    %v996 = vpack.c.b16 %v744, %v732
    %v997 = vpack.c.b16 %v745, %v733
    %v998 = vpack.c.b16 %v746, %v734
    %v999 = vpack.c.b16 %v747, %v735
    %v1000 = vpack.c.b16 %v748, %v736
    %v1001 = vpack.c.b16 %v749, %v737
    %v1002 = vpack.c.b16 %v750, %v738
    %v1003 = vpack.c.b16 %v751, %v739
    %v1004 = vpack.c.b16 %v764, %v752
    %v1005 = vpack.c.b16 %v765, %v753
    %v1006 = vpack.c.b16 %v766, %v754
    %v1007 = vpack.c.b16 %v767, %v755
    %v1008 = vpack.c.b16 %v768, %v756
    %v1009 = vpack.c.b16 %v769, %v757
    %v1010 = vpack.c.b16 %v770, %v758
    %v1011 = vpack.c.b16 %v771, %v759
    %v1012 = vpack.c.b16 %v772, %v760
    %v1013 = vpack.c.b16 %v773, %v761
    %v1014 = vpack.c.b16 %v774, %v762
    %v1015 = vpack.c.b16 %v775, %v763
    %v1016 = vpack.c.b16 %v788, %v776
    %v1017 = vpack.c.b16 %v789, %v777
    %v1018 = vpack.c.b16 %v790, %v778
    %v1019 = vpack.c.b16 %v791, %v779
    %v1020 = vpack.c.b16 %v792, %v780
    %v1021 = vpack.c.b16 %v793, %v781
    %v1022 = vpack.c.b16 %v794, %v782
    %v1023 = vpack.c.b16 %v795, %v783
    %v1024 = vpack.c.b16 %v796, %v784
    %v1025 = vpack.c.b16 %v797, %v785
    %v1026 = vpack.c.b16 %v798, %v786
    %v1027 = vpack.c.b16 %v799, %v787
    %v1028 = vpack.c.b16 %v812, %v800
    %v1029 = vpack.c.b16 %v813, %v801
    %v1030 = vpack.c.b16 %v814, %v802
    %v1031 = vpack.c.b16 %v815, %v803
    %v1032 = vpack.c.b16 %v816, %v804
    %v1033 = vpack.c.b16 %v817, %v805
    %v1034 = vpack.c.b16 %v818, %v806
    %v1035 = vpack.c.b16 %v819, %v807
    %v1036 = vpack.c.b16 %v820, %v808
    %v1037 = vpack.c.b16 %v821, %v809
    %v1038 = vpack.c.b16 %v822, %v810
    %v1039 = vpack.c.b16 %v823, %v811
    %v1040 = vpack.c.b16 %v836, %v824
    %v1041 = vpack.c.b16 %v837, %v825
    %v1042 = vpack.c.b16 %v838, %v826
    %v1043 = vpack.c.b16 %v839, %v827
    %v1044 = vpack.c.b16 %v840, %v828
    %v1045 = vpack.c.b16 %v841, %v829
    %v1046 = vpack.c.b16 %v842, %v830
    %v1047 = vpack.c.b16 %v843, %v831
    %v1048 = vpack.c.b16 %v844, %v832
    %v1049 = vpack.c.b16 %v845, %v833
    %v1050 = vpack.c.b16 %v846, %v834
    %v1051 = vpack.c.b16 %v847, %v835
    %v1052 = vpack.c.b16 %v860, %v848
    %v1053 = vpack.c.b16 %v861, %v849
    %v1054 = vpack.c.b16 %v862, %v850
    %v1055 = vpack.c.b16 %v863, %v851
    %v1056 = vpack.c.b16 %v864, %v852
    %v1057 = vpack.c.b16 %v865, %v853
    %v1058 = vpack.c.b16 %v866, %v854
    %v1059 = vpack.c.b16 %v867, %v855
    %v1060 = vpack.c.b16 %v868, %v856
    %v1061 = vpack.c.b16 %v869, %v857
    %v1062 = vpack.c.b16 %v870, %v858
    %v1063 = vpack.c.b16 %v871, %v859
    %1256 = vmatprep.subr.bf16.mxu0 %v957
    %1257 = vmatpush1.bf16.msra.mxu0 %v956
    %1258 = vmatprep.subr.bf16.mxu0 %v945
    %1259 = vmatpush1.bf16.msra.mxu0 %v944
    %1260 = vmatprep.subr.bf16.mxu0 %v933
    %1261 = vmatpush1.bf16.msra.mxu0 %v932
    %1262 = vmatprep.subr.bf16.mxu0 %v921
    %1263 = vmatpush1.bf16.msra.mxu0 %v920
    %1264 = vmatprep.subr.bf16.mxu0 %v909
    %1265 = vmatpush1.bf16.msra.mxu0 %v908
    %1266 = vmatprep.subr.bf16.mxu0 %v897
    %1267 = vmatpush1.bf16.msra.mxu0 %v896
    %1268 = vmatprep.subr.bf16.mxu0 %v885
    %1269 = vmatpush1.bf16.msra.mxu0 %v884
    %1270 = vmatprep.subr.bf16.mxu0 %v873
    %1271 = vmatpush1.bf16.msra.mxu0 %v872
    %1272 = vmatprep.subr.bf16.mxu0 %v1053
    %1273 = vmatpush2.bf16.msra.mxu0 %v1052
    %1274 = vmatprep.subr.bf16.mxu0 %v1041
    %1275 = vmatpush2.bf16.msra.mxu0 %v1040
    %1276 = vmatprep.subr.bf16.mxu0 %v1029
    %1277 = vmatpush2.bf16.msra.mxu0 %v1028
    %1278 = vmatprep.subr.bf16.mxu0 %v1017
    %1279 = vmatpush2.bf16.msra.mxu0 %v1016
    %1280 = vmatprep.subr.bf16.mxu0 %v1005
    %1281 = vmatpush2.bf16.msra.mxu0 %v1004
    %1282 = vmatprep.subr.bf16.mxu0 %v993
    %1283 = vmatpush2.bf16.msra.mxu0 %v992
    %1284 = vmatprep.subr.bf16.mxu0 %v981
    %1285 = vmatpush2.bf16.msra.mxu0 %v980
    %1286 = vmatprep.subr.bf16.mxu0 %v969
    %1287 = vmatpush2.bf16.msra.mxu0 %v968
    %1288 = vmatprep.mubr.bf16.mxu0 %v103
    %1289 = vmatmul.mubr.bf16.gmra.mxu0 %v102
    %v1290 = vpop.f32.mrf.mxu0
    %v1291 = vadd.f32 0.0, %v1290
    %v1292 = vpop.f32.mrf.mxu0
    %v1293 = vadd.f32 0.0, %v1292
    %v1294 = vpop.f32.mrf.mxu0
    %v1295 = vpop.f32.mrf.mxu0
    %1296 = vdwg.mxu0
    %1297 = vmatprep.subr.bf16.mxu0 %v959
    %1298 = vmatpush1.bf16.msra.mxu0 %v958
    %1299 = vmatprep.subr.bf16.mxu0 %v947
    %1300 = vmatpush1.bf16.msra.mxu0 %v946
    %1301 = vmatprep.subr.bf16.mxu0 %v935
    %1302 = vmatpush1.bf16.msra.mxu0 %v934
    %1303 = vmatprep.subr.bf16.mxu0 %v923
    %1304 = vmatpush1.bf16.msra.mxu0 %v922
    %1305 = vmatprep.subr.bf16.mxu0 %v911
    %1306 = vmatpush1.bf16.msra.mxu0 %v910
    %1307 = vmatprep.subr.bf16.mxu0 %v899
    %1308 = vmatpush1.bf16.msra.mxu0 %v898
    %1309 = vmatprep.subr.bf16.mxu0 %v887
    %1310 = vmatpush1.bf16.msra.mxu0 %v886
    %1311 = vmatprep.subr.bf16.mxu0 %v875
    %1312 = vmatpush1.bf16.msra.mxu0 %v874
    %1313 = vmatprep.subr.bf16.mxu0 %v1055
    %1314 = vmatpush2.bf16.msra.mxu0 %v1054
    %1315 = vmatprep.subr.bf16.mxu0 %v1043
    %1316 = vmatpush2.bf16.msra.mxu0 %v1042
    %1317 = vmatprep.subr.bf16.mxu0 %v1031
    %1318 = vmatpush2.bf16.msra.mxu0 %v1030
    %1319 = vmatprep.subr.bf16.mxu0 %v1019
    %1320 = vmatpush2.bf16.msra.mxu0 %v1018
    %1321 = vmatprep.subr.bf16.mxu0 %v1007
    %1322 = vmatpush2.bf16.msra.mxu0 %v1006
    %1323 = vmatprep.subr.bf16.mxu0 %v995
    %1324 = vmatpush2.bf16.msra.mxu0 %v994
    %1325 = vmatprep.subr.bf16.mxu0 %v983
    %1326 = vmatpush2.bf16.msra.mxu0 %v982
    %1327 = vmatprep.subr.bf16.mxu0 %v971
    %1328 = vmatpush2.bf16.msra.mxu0 %v970
    %1329 = vmatprep.mubr.bf16.mxu0 %v103
    %1330 = vmatmul.mubr.bf16.gmra.mxu0 %v102
    %v1331 = vpop.f32.mrf.mxu0
    %v1332 = vadd.f32 0.0, %v1331
    %v1333 = vpop.f32.mrf.mxu0
    %v1334 = vadd.f32 0.0, %v1333
    %v1335 = vpop.f32.mrf.mxu0
    %v1336 = vpop.f32.mrf.mxu0
    %1337 = vdwg.mxu0
    %1338 = vmatprep.subr.bf16.mxu0 %v961
    %1339 = vmatpush1.bf16.msra.mxu0 %v960
    %1340 = vmatprep.subr.bf16.mxu0 %v949
    %1341 = vmatpush1.bf16.msra.mxu0 %v948
    %1342 = vmatprep.subr.bf16.mxu0 %v937
    %1343 = vmatpush1.bf16.msra.mxu0 %v936
    %1344 = vmatprep.subr.bf16.mxu0 %v925
    %1345 = vmatpush1.bf16.msra.mxu0 %v924
    %1346 = vmatprep.subr.bf16.mxu0 %v913
    %1347 = vmatpush1.bf16.msra.mxu0 %v912
    %1348 = vmatprep.subr.bf16.mxu0 %v901
    %1349 = vmatpush1.bf16.msra.mxu0 %v900
    %1350 = vmatprep.subr.bf16.mxu0 %v889
    %1351 = vmatpush1.bf16.msra.mxu0 %v888
    %1352 = vmatprep.subr.bf16.mxu0 %v877
    %1353 = vmatpush1.bf16.msra.mxu0 %v876
    %1354 = vmatprep.subr.bf16.mxu0 %v1057
    %1355 = vmatpush2.bf16.msra.mxu0 %v1056
    %1356 = vmatprep.subr.bf16.mxu0 %v1045
    %1357 = vmatpush2.bf16.msra.mxu0 %v1044
    %1358 = vmatprep.subr.bf16.mxu0 %v1033
    %1359 = vmatpush2.bf16.msra.mxu0 %v1032
    %1360 = vmatprep.subr.bf16.mxu0 %v1021
    %1361 = vmatpush2.bf16.msra.mxu0 %v1020
    %1362 = vmatprep.subr.bf16.mxu0 %v1009
    %1363 = vmatpush2.bf16.msra.mxu0 %v1008
    %1364 = vmatprep.subr.bf16.mxu0 %v997
    %1365 = vmatpush2.bf16.msra.mxu0 %v996
    %1366 = vmatprep.subr.bf16.mxu0 %v985
    %1367 = vmatpush2.bf16.msra.mxu0 %v984
    %1368 = vmatprep.subr.bf16.mxu0 %v973
    %1369 = vmatpush2.bf16.msra.mxu0 %v972
    %1370 = vmatprep.mubr.bf16.mxu0 %v103
    %1371 = vmatmul.mubr.bf16.gmra.mxu0 %v102
    %v1372 = vpop.f32.mrf.mxu0
    %v1373 = vadd.f32 0.0, %v1372
    %v1374 = vpop.f32.mrf.mxu0
    %v1375 = vadd.f32 0.0, %v1374
    %v1376 = vpop.f32.mrf.mxu0
    %v1377 = vpop.f32.mrf.mxu0
    %1378 = vdwg.mxu0
    %1379 = vmatprep.subr.bf16.mxu0 %v963
    %1380 = vmatpush1.bf16.msra.mxu0 %v962
    %1381 = vmatprep.subr.bf16.mxu0 %v951
    %1382 = vmatpush1.bf16.msra.mxu0 %v950
    %1383 = vmatprep.subr.bf16.mxu0 %v939
    %1384 = vmatpush1.bf16.msra.mxu0 %v938
    %1385 = vmatprep.subr.bf16.mxu0 %v927
    %1386 = vmatpush1.bf16.msra.mxu0 %v926
    %1387 = vmatprep.subr.bf16.mxu0 %v915
    %1388 = vmatpush1.bf16.msra.mxu0 %v914
    %1389 = vmatprep.subr.bf16.mxu0 %v903
    %1390 = vmatpush1.bf16.msra.mxu0 %v902
    %1391 = vmatprep.subr.bf16.mxu0 %v891
    %1392 = vmatpush1.bf16.msra.mxu0 %v890
    %1393 = vmatprep.subr.bf16.mxu0 %v879
    %1394 = vmatpush1.bf16.msra.mxu0 %v878
    %1395 = vmatprep.subr.bf16.mxu0 %v1059
    %1396 = vmatpush2.bf16.msra.mxu0 %v1058
    %1397 = vmatprep.subr.bf16.mxu0 %v1047
    %1398 = vmatpush2.bf16.msra.mxu0 %v1046
    %1399 = vmatprep.subr.bf16.mxu0 %v1035
    %1400 = vmatpush2.bf16.msra.mxu0 %v1034
    %1401 = vmatprep.subr.bf16.mxu0 %v1023
    %1402 = vmatpush2.bf16.msra.mxu0 %v1022
    %1403 = vmatprep.subr.bf16.mxu0 %v1011
    %1404 = vmatpush2.bf16.msra.mxu0 %v1010
    %1405 = vmatprep.subr.bf16.mxu0 %v999
    %1406 = vmatpush2.bf16.msra.mxu0 %v998
    %1407 = vmatprep.subr.bf16.mxu0 %v987
    %1408 = vmatpush2.bf16.msra.mxu0 %v986
    %1409 = vmatprep.subr.bf16.mxu0 %v975
    %1410 = vmatpush2.bf16.msra.mxu0 %v974
    %1411 = vmatprep.mubr.bf16.mxu0 %v103
    %1412 = vmatmul.mubr.bf16.gmra.mxu0 %v102
    %v1413 = vpop.f32.mrf.mxu0
    %v1414 = vadd.f32 0.0, %v1413
    %v1415 = vpop.f32.mrf.mxu0
    %v1416 = vadd.f32 0.0, %v1415
    %v1417 = vpop.f32.mrf.mxu0
    %v1418 = vpop.f32.mrf.mxu0
    %1419 = vdwg.mxu0
    %1420 = vmatprep.subr.bf16.mxu0 %v965
    %1421 = vmatpush1.bf16.msra.mxu0 %v964
    %1422 = vmatprep.subr.bf16.mxu0 %v953
    %1423 = vmatpush1.bf16.msra.mxu0 %v952
    %1424 = vmatprep.subr.bf16.mxu0 %v941
    %1425 = vmatpush1.bf16.msra.mxu0 %v940
    %1426 = vmatprep.subr.bf16.mxu0 %v929
    %1427 = vmatpush1.bf16.msra.mxu0 %v928
    %1428 = vmatprep.subr.bf16.mxu0 %v917
    %1429 = vmatpush1.bf16.msra.mxu0 %v916
    %1430 = vmatprep.subr.bf16.mxu0 %v905
    %1431 = vmatpush1.bf16.msra.mxu0 %v904
    %1432 = vmatprep.subr.bf16.mxu0 %v893
    %1433 = vmatpush1.bf16.msra.mxu0 %v892
    %1434 = vmatprep.subr.bf16.mxu0 %v881
    %1435 = vmatpush1.bf16.msra.mxu0 %v880
    %1436 = vmatprep.subr.bf16.mxu0 %v1061
    %1437 = vmatpush2.bf16.msra.mxu0 %v1060
    %1438 = vmatprep.subr.bf16.mxu0 %v1049
    %1439 = vmatpush2.bf16.msra.mxu0 %v1048
    %1440 = vmatprep.subr.bf16.mxu0 %v1037
    %1441 = vmatpush2.bf16.msra.mxu0 %v1036
    %1442 = vmatprep.subr.bf16.mxu0 %v1025
    %1443 = vmatpush2.bf16.msra.mxu0 %v1024
    %1444 = vmatprep.subr.bf16.mxu0 %v1013
    %1445 = vmatpush2.bf16.msra.mxu0 %v1012
    %1446 = vmatprep.subr.bf16.mxu0 %v1001
    %1447 = vmatpush2.bf16.msra.mxu0 %v1000
    %1448 = vmatprep.subr.bf16.mxu0 %v989
    %1449 = vmatpush2.bf16.msra.mxu0 %v988
    %1450 = vmatprep.subr.bf16.mxu0 %v977
    %1451 = vmatpush2.bf16.msra.mxu0 %v976
    %1452 = vmatprep.mubr.bf16.mxu0 %v103
    %1453 = vmatmul.mubr.bf16.gmra.mxu0 %v102
    %v1454 = vpop.f32.mrf.mxu0
    %v1455 = vadd.f32 0.0, %v1454
    %v1456 = vpop.f32.mrf.mxu0
    %v1457 = vadd.f32 0.0, %v1456
    %v1458 = vpop.f32.mrf.mxu0
    %v1459 = vpop.f32.mrf.mxu0
    %1460 = vdwg.mxu0
    %1461 = vmatprep.subr.bf16.mxu0 %v967
    %1462 = vmatpush1.bf16.msra.mxu0 %v966
    %1463 = vmatprep.subr.bf16.mxu0 %v955
    %1464 = vmatpush1.bf16.msra.mxu0 %v954
    %1465 = vmatprep.subr.bf16.mxu0 %v943
    %1466 = vmatpush1.bf16.msra.mxu0 %v942
    %1467 = vmatprep.subr.bf16.mxu0 %v931
    %1468 = vmatpush1.bf16.msra.mxu0 %v930
    %1469 = vmatprep.subr.bf16.mxu0 %v919
    %1470 = vmatpush1.bf16.msra.mxu0 %v918
    %1471 = vmatprep.subr.bf16.mxu0 %v907
    %1472 = vmatpush1.bf16.msra.mxu0 %v906
    %1473 = vmatprep.subr.bf16.mxu0 %v895
    %1474 = vmatpush1.bf16.msra.mxu0 %v894
    %1475 = vmatprep.subr.bf16.mxu0 %v883
    %1476 = vmatpush1.bf16.msra.mxu0 %v882
    %1477 = vmatprep.subr.bf16.mxu0 %v1063
    %1478 = vmatpush2.bf16.msra.mxu0 %v1062
    %1479 = vmatprep.subr.bf16.mxu0 %v1051
    %1480 = vmatpush2.bf16.msra.mxu0 %v1050
    %1481 = vmatprep.subr.bf16.mxu0 %v1039
    %1482 = vmatpush2.bf16.msra.mxu0 %v1038
    %1483 = vmatprep.subr.bf16.mxu0 %v1027
    %1484 = vmatpush2.bf16.msra.mxu0 %v1026
    %1485 = vmatprep.subr.bf16.mxu0 %v1015
    %1486 = vmatpush2.bf16.msra.mxu0 %v1014
    %1487 = vmatprep.subr.bf16.mxu0 %v1003
    %1488 = vmatpush2.bf16.msra.mxu0 %v1002
    %1489 = vmatprep.subr.bf16.mxu0 %v991
    %1490 = vmatpush2.bf16.msra.mxu0 %v990
    %1491 = vmatprep.subr.bf16.mxu0 %v979
    %1492 = vmatpush2.bf16.msra.mxu0 %v978
    %1493 = vmatprep.mubr.bf16.mxu0 %v103
    %1494 = vmatmul.mubr.bf16.gmra.mxu0 %v102
    %v1495 = vpop.f32.mrf.mxu0
    %v1496 = vadd.f32 0.0, %v1495
    %v1497 = vpop.f32.mrf.mxu0
    %v1498 = vadd.f32 0.0, %v1497
    %v1499 = vpop.f32.mrf.mxu0
    %v1500 = vpop.f32.mrf.mxu0
    %1501 = vdwg.mxu0
    %v1502 = vmax.f32 %v1291, %v1334
    %v1503 = vmax.f32 %v1293, %v1373
    %v1504 = vmax.f32 %v1332, %v1375
    %v1505 = vmax.f32 %v1414, %v1457
    %v1506 = vmax.f32 %v1416, %v1496
    %v1507 = vmax.f32 %v1455, %v1498
    %v1508 = vmax.f32 %v1502, %v1505
    %v1509 = vmax.f32 %v1503, %v1506
    %v1510 = vmax.f32 %v1504, %v1507
    %v1511 = vld [vmem:[%s2] sm:$0x7]
    %v1513 = vlaneseq
    %v1514 = vshrl.u32 %v1513, 7
    %v1515 = vsub.s32 0, %v1514
    %v1516 = vrot.slane %v1511, %v1515
    %v1517 = vlaneseq
    %v1518 = vshrl.u32 %v1517, 7
    %v1519 = vsub.s32 1, %v1518
    %v1520 = vrot.slane %v1511, %v1519
    %v1521 = vlaneseq
    %v1522 = vshrl.u32 %v1521, 7
    %v1523 = vsub.s32 2, %v1522
    %v1524 = vrot.slane %v1511, %v1523
    %v1528 = vadd.f32 %v1508, %v1516
    %v1529 = vadd.f32 %v1509, %v1520
    %v1530 = vadd.f32 %v1510, %v1524
    %v1531 = vmax.f32 %v1528, 0.0
    %v1532 = vmax.f32 %v1529, 0.0
    %v1533 = vmax.f32 %v1530, 0.0
    %v1534 = vpack.c.bf16 %v1531, %v1531
    %v1535 = vpack.c.bf16 %v1532, %v1532
    %v1536 = vpack.c.bf16 %v1533, %v1533
    %v1537 = vld [vmem:[#allocation7] sm:$0xff]
    %v1538 = vld [vmem:[#allocation7 + $0x8] sm:$0xff]
    %v1539 = vld [vmem:[#allocation7 + $0x10] sm:$0xff]
    %v1540 = vld [vmem:[#allocation7 + $0x18] sm:$0xff]
    %v1541 = vld [vmem:[#allocation7 + $0x20] sm:$0xff]
    %v1542 = vld [vmem:[#allocation7 + $0x28] sm:$0xff]
    %v1543 = vld [vmem:[#allocation7 + $0x30] sm:$0xff]
    %v1544 = vld [vmem:[#allocation7 + $0x38] sm:$0xff]
    %v1545 = vld [vmem:[#allocation7 + $0x40] sm:$0xff]
    %v1546 = vld [vmem:[#allocation7 + $0x48] sm:$0xff]
    %v1547 = vld [vmem:[#allocation7 + $0x50] sm:$0xff]
    %v1548 = vld [vmem:[#allocation7 + $0x58] sm:$0xff]
    %v1549 = vld [vmem:[#allocation7 + $0x60] sm:$0xff]
    %v1550 = vld [vmem:[#allocation7 + $0x68] sm:$0xff]
    %v1551 = vld [vmem:[#allocation7 + $0x70] sm:$0xff]
    %v1552 = vld [vmem:[#allocation7 + $0x78] sm:$0xff]
    %v1553 = vld [vmem:[#allocation7 + $0x80] sm:$0xff]
    %v1554 = vld [vmem:[#allocation7 + $0x88] sm:$0xff]
    %v1555 = vld [vmem:[#allocation7 + $0x90] sm:$0xff]
    %v1556 = vld [vmem:[#allocation7 + $0x98] sm:$0xff]
    %v1557 = vld [vmem:[#allocation7 + $0xa0] sm:$0xff]
    %v1558 = vld [vmem:[#allocation7 + $0xa8] sm:$0xff]
    %v1559 = vld [vmem:[#allocation7 + $0xb0] sm:$0xff]
    %v1560 = vld [vmem:[#allocation7 + $0xb8] sm:$0xff]
    %v1561 = vld [vmem:[#allocation7 + $0xc0] sm:$0xff]
    %v1562 = vld [vmem:[#allocation7 + $0xc8] sm:$0xff]
    %v1563 = vld [vmem:[#allocation7 + $0xd0] sm:$0xff]
    %v1564 = vld [vmem:[#allocation7 + $0xd8] sm:$0xff]
    %v1565 = vld [vmem:[#allocation7 + $0xe0] sm:$0xff]
    %v1566 = vld [vmem:[#allocation7 + $0xe8] sm:$0xff]
    %v1567 = vld [vmem:[#allocation7 + $0xf0] sm:$0xff]
    %v1568 = vld [vmem:[#allocation7 + $0xf8] sm:$0xff]
    %v1569 = vld [vmem:[#allocation7 + $0x100] sm:$0xff]
    %v1570 = vld [vmem:[#allocation7 + $0x108] sm:$0xff]
    %v1571 = vld [vmem:[#allocation7 + $0x110] sm:$0xff]
    %v1572 = vld [vmem:[#allocation7 + $0x118] sm:$0xff]
    %v1573 = vld [vmem:[#allocation7 + $0x120] sm:$0xff]
    %v1574 = vld [vmem:[#allocation7 + $0x128] sm:$0xff]
    %v1575 = vld [vmem:[#allocation7 + $0x130] sm:$0xff]
    %v1576 = vld [vmem:[#allocation7 + $0x138] sm:$0xff]
    %v1577 = vld [vmem:[#allocation7 + $0x140] sm:$0xff]
    %v1578 = vld [vmem:[#allocation7 + $0x148] sm:$0xff]
    %v1579 = vld [vmem:[#allocation7 + $0x150] sm:$0xff]
    %v1580 = vld [vmem:[#allocation7 + $0x158] sm:$0xff]
    %v1581 = vld [vmem:[#allocation7 + $0x160] sm:$0xff]
    %v1582 = vld [vmem:[#allocation7 + $0x168] sm:$0xff]
    %v1583 = vld [vmem:[#allocation7 + $0x170] sm:$0xff]
    %v1584 = vld [vmem:[#allocation7 + $0x178] sm:$0xff]
    %v1585 = vld [vmem:[%s4] sm:$0x3]
    %v1587 = vlaneseq
    %v1588 = vshrl.u32 %v1587, 7
    %v1589 = vsub.s32 0, %v1588
    %v1590 = vrot.slane %v1585, %v1589
    %v1591 = vlaneseq
    %v1592 = vshrl.u32 %v1591, 7
    %v1593 = vsub.s32 1, %v1592
    %v1594 = vrot.slane %v1585, %v1593
    %v1645 = vunpack.c.l.b16 %v1537
    %v1646 = vunpack.c.h.b16 %v1537
    %v1647 = vunpack.c.l.b16 %v1538
    %v1648 = vunpack.c.h.b16 %v1538
    %v1649 = vunpack.c.l.b16 %v1539
    %v1650 = vunpack.c.h.b16 %v1539
    %v1651 = vunpack.c.l.b16 %v1540
    %v1652 = vunpack.c.h.b16 %v1540
    %v1653 = vunpack.c.l.b16 %v1541
    %v1654 = vunpack.c.h.b16 %v1541
    %v1655 = vunpack.c.l.b16 %v1542
    %v1656 = vunpack.c.h.b16 %v1542
    %v1657 = vunpack.c.l.b16 %v1543
    %v1658 = vunpack.c.h.b16 %v1543
    %v1659 = vunpack.c.l.b16 %v1544
    %v1660 = vunpack.c.h.b16 %v1544
    %v1661 = vunpack.c.l.b16 %v1545
    %v1662 = vunpack.c.h.b16 %v1545
    %v1663 = vunpack.c.l.b16 %v1546
    %v1664 = vunpack.c.h.b16 %v1546
    %v1665 = vunpack.c.l.b16 %v1547
    %v1666 = vunpack.c.h.b16 %v1547
    %v1667 = vunpack.c.l.b16 %v1548
    %v1668 = vunpack.c.h.b16 %v1548
    %v1669 = vunpack.c.l.b16 %v1549
    %v1670 = vunpack.c.h.b16 %v1549
    %v1671 = vunpack.c.l.b16 %v1550
    %v1672 = vunpack.c.h.b16 %v1550
    %v1673 = vunpack.c.l.b16 %v1551
    %v1674 = vunpack.c.h.b16 %v1551
    %v1675 = vunpack.c.l.b16 %v1552
    %v1676 = vunpack.c.h.b16 %v1552
    %v1677 = vunpack.c.l.b16 %v1553
    %v1678 = vunpack.c.h.b16 %v1553
    %v1679 = vunpack.c.l.b16 %v1554
    %v1680 = vunpack.c.h.b16 %v1554
    %v1681 = vunpack.c.l.b16 %v1555
    %v1682 = vunpack.c.h.b16 %v1555
    %v1683 = vunpack.c.l.b16 %v1556
    %v1684 = vunpack.c.h.b16 %v1556
    %v1685 = vunpack.c.l.b16 %v1557
    %v1686 = vunpack.c.h.b16 %v1557
    %v1687 = vunpack.c.l.b16 %v1558
    %v1688 = vunpack.c.h.b16 %v1558
    %v1689 = vunpack.c.l.b16 %v1559
    %v1690 = vunpack.c.h.b16 %v1559
    %v1691 = vunpack.c.l.b16 %v1560
    %v1692 = vunpack.c.h.b16 %v1560
    %v1693 = vunpack.c.l.b16 %v1561
    %v1694 = vunpack.c.h.b16 %v1561
    %v1695 = vunpack.c.l.b16 %v1562
    %v1696 = vunpack.c.h.b16 %v1562
    %v1697 = vunpack.c.l.b16 %v1563
    %v1698 = vunpack.c.h.b16 %v1563
    %v1699 = vunpack.c.l.b16 %v1564
    %v1700 = vunpack.c.h.b16 %v1564
    %v1701 = vunpack.c.l.b16 %v1565
    %v1702 = vunpack.c.h.b16 %v1565
    %v1703 = vunpack.c.l.b16 %v1566
    %v1704 = vunpack.c.h.b16 %v1566
    %v1705 = vunpack.c.l.b16 %v1567
    %v1706 = vunpack.c.h.b16 %v1567
    %v1707 = vunpack.c.l.b16 %v1568
    %v1708 = vunpack.c.h.b16 %v1568
    %v1709 = vunpack.c.l.b16 %v1569
    %v1710 = vunpack.c.h.b16 %v1569
    %v1711 = vunpack.c.l.b16 %v1570
    %v1712 = vunpack.c.h.b16 %v1570
    %v1713 = vunpack.c.l.b16 %v1571
    %v1714 = vunpack.c.h.b16 %v1571
    %v1715 = vunpack.c.l.b16 %v1572
    %v1716 = vunpack.c.h.b16 %v1572
    %v1717 = vunpack.c.l.b16 %v1573
    %v1718 = vunpack.c.h.b16 %v1573
    %v1719 = vunpack.c.l.b16 %v1574
    %v1720 = vunpack.c.h.b16 %v1574
    %v1721 = vunpack.c.l.b16 %v1575
    %v1722 = vunpack.c.h.b16 %v1575
    %v1723 = vunpack.c.l.b16 %v1576
    %v1724 = vunpack.c.h.b16 %v1576
    %v1725 = vunpack.c.l.b16 %v1577
    %v1726 = vunpack.c.h.b16 %v1577
    %v1727 = vunpack.c.l.b16 %v1578
    %v1728 = vunpack.c.h.b16 %v1578
    %v1729 = vunpack.c.l.b16 %v1579
    %v1730 = vunpack.c.h.b16 %v1579
    %v1731 = vunpack.c.l.b16 %v1580
    %v1732 = vunpack.c.h.b16 %v1580
    %v1733 = vunpack.c.l.b16 %v1581
    %v1734 = vunpack.c.h.b16 %v1581
    %v1735 = vunpack.c.l.b16 %v1582
    %v1736 = vunpack.c.h.b16 %v1582
    %v1737 = vunpack.c.l.b16 %v1583
    %v1738 = vunpack.c.h.b16 %v1583
    %v1739 = vunpack.c.l.b16 %v1584
    %v1740 = vunpack.c.h.b16 %v1584
    %v1741 = vpack.c.b16 %v1647, %v1645
    %v1742 = vpack.c.b16 %v1648, %v1646
    %v1743 = vpack.c.b16 %v1651, %v1649
    %v1744 = vpack.c.b16 %v1652, %v1650
    %v1745 = vpack.c.b16 %v1655, %v1653
    %v1746 = vpack.c.b16 %v1656, %v1654
    %v1747 = vpack.c.b16 %v1659, %v1657
    %v1748 = vpack.c.b16 %v1660, %v1658
    %v1749 = vpack.c.b16 %v1663, %v1661
    %v1750 = vpack.c.b16 %v1664, %v1662
    %v1751 = vpack.c.b16 %v1667, %v1665
    %v1752 = vpack.c.b16 %v1668, %v1666
    %v1753 = vpack.c.b16 %v1671, %v1669
    %v1754 = vpack.c.b16 %v1672, %v1670
    %v1755 = vpack.c.b16 %v1675, %v1673
    %v1756 = vpack.c.b16 %v1676, %v1674
    %v1757 = vpack.c.b16 %v1679, %v1677
    %v1758 = vpack.c.b16 %v1680, %v1678
    %v1759 = vpack.c.b16 %v1683, %v1681
    %v1760 = vpack.c.b16 %v1684, %v1682
    %v1761 = vpack.c.b16 %v1687, %v1685
    %v1762 = vpack.c.b16 %v1688, %v1686
    %v1763 = vpack.c.b16 %v1691, %v1689
    %v1764 = vpack.c.b16 %v1692, %v1690
    %v1765 = vpack.c.b16 %v1695, %v1693
    %v1766 = vpack.c.b16 %v1696, %v1694
    %v1767 = vpack.c.b16 %v1699, %v1697
    %v1768 = vpack.c.b16 %v1700, %v1698
    %v1769 = vpack.c.b16 %v1703, %v1701
    %v1770 = vpack.c.b16 %v1704, %v1702
    %v1771 = vpack.c.b16 %v1707, %v1705
    %v1772 = vpack.c.b16 %v1708, %v1706
    %v1773 = vpack.c.b16 %v1711, %v1709
    %v1774 = vpack.c.b16 %v1712, %v1710
    %v1775 = vpack.c.b16 %v1715, %v1713
    %v1776 = vpack.c.b16 %v1716, %v1714
    %v1777 = vpack.c.b16 %v1719, %v1717
    %v1778 = vpack.c.b16 %v1720, %v1718
    %v1779 = vpack.c.b16 %v1723, %v1721
    %v1780 = vpack.c.b16 %v1724, %v1722
    %v1781 = vpack.c.b16 %v1727, %v1725
    %v1782 = vpack.c.b16 %v1728, %v1726
    %v1783 = vpack.c.b16 %v1731, %v1729
    %v1784 = vpack.c.b16 %v1732, %v1730
    %v1785 = vpack.c.b16 %v1735, %v1733
    %v1786 = vpack.c.b16 %v1736, %v1734
    %v1787 = vpack.c.b16 %v1739, %v1737
    %v1788 = vpack.c.b16 %v1740, %v1738
    %1837 = vmatprep.subr.bf16.mxu0 %v1756
    %1838 = vmatpush1.bf16.msra.mxu0 %v1755
    %1839 = vmatprep.subr.bf16.mxu0 %v1754
    %1840 = vmatpush1.bf16.msra.mxu0 %v1753
    %1841 = vmatprep.subr.bf16.mxu0 %v1752
    %1842 = vmatpush1.bf16.msra.mxu0 %v1751
    %1843 = vmatprep.subr.bf16.mxu0 %v1750
    %1844 = vmatpush1.bf16.msra.mxu0 %v1749
    %1845 = vmatprep.subr.bf16.mxu0 %v1748
    %1846 = vmatpush1.bf16.msra.mxu0 %v1747
    %1847 = vmatprep.subr.bf16.mxu0 %v1746
    %1848 = vmatpush1.bf16.msra.mxu0 %v1745
    %1849 = vmatprep.subr.bf16.mxu0 %v1744
    %1850 = vmatpush1.bf16.msra.mxu0 %v1743
    %1851 = vmatprep.subr.bf16.mxu0 %v1742
    %1852 = vmatpush1.bf16.msra.mxu0 %v1741
    %1853 = vmatprep.subr.bf16.mxu0 %v1772
    %1854 = vmatpush2.bf16.msra.mxu0 %v1771
    %1855 = vmatprep.subr.bf16.mxu0 %v1770
    %1856 = vmatpush2.bf16.msra.mxu0 %v1769
    %1857 = vmatprep.subr.bf16.mxu0 %v1768
    %1858 = vmatpush2.bf16.msra.mxu0 %v1767
    %1859 = vmatprep.subr.bf16.mxu0 %v1766
    %1860 = vmatpush2.bf16.msra.mxu0 %v1765
    %1861 = vmatprep.subr.bf16.mxu0 %v1764
    %1862 = vmatpush2.bf16.msra.mxu0 %v1763
    %1863 = vmatprep.subr.bf16.mxu0 %v1762
    %1864 = vmatpush2.bf16.msra.mxu0 %v1761
    %1865 = vmatprep.subr.bf16.mxu0 %v1760
    %1866 = vmatpush2.bf16.msra.mxu0 %v1759
    %1867 = vmatprep.subr.bf16.mxu0 %v1758
    %1868 = vmatpush2.bf16.msra.mxu0 %v1757
    %1869 = vmatprep.mubr.bf16.mxu0 %v1535
    %1870 = vmatmul.mubr.bf16.gmra.mxu0 %v1534
    %v1871 = vpop.f32.mrf.mxu0
    %v1872 = vadd.f32 %v1590, %v1871
    %v1873 = vpop.f32.mrf.mxu0
    %v1874 = vadd.f32 %v1594, %v1873
    %v1875 = vpop.f32.mrf.mxu0
    %v1876 = vpop.f32.mrf.mxu0
    %1877 = vdwg.mxu0
    %1878 = vmatprep.subr.bf16.mxu0 %v1788
    %1879 = vmatpush1.bf16.msra.mxu0 %v1787
    %1880 = vmatprep.subr.bf16.mxu0 %v1786
    %1881 = vmatpush1.bf16.msra.mxu0 %v1785
    %1882 = vmatprep.subr.bf16.mxu0 %v1784
    %1883 = vmatpush1.bf16.msra.mxu0 %v1783
    %1884 = vmatprep.subr.bf16.mxu0 %v1782
    %1885 = vmatpush1.bf16.msra.mxu0 %v1781
    %1886 = vmatprep.subr.bf16.mxu0 %v1780
    %1887 = vmatpush1.bf16.msra.mxu0 %v1779
    %1888 = vmatprep.subr.bf16.mxu0 %v1778
    %1889 = vmatpush1.bf16.msra.mxu0 %v1777
    %1890 = vmatprep.subr.bf16.mxu0 %v1776
    %1891 = vmatpush1.bf16.msra.mxu0 %v1775
    %1892 = vmatprep.subr.bf16.mxu0 %v1774
    %1893 = vmatpush1.bf16.msra.mxu0 %v1773
    %1894 = vmatprep.subr.bf16.mxu0 0
    %1895 = vmatpush2.bf16.msra.mxu0 0
    %1896 = vmatprep.subr.bf16.mxu0 0
    %1897 = vmatpush2.bf16.msra.mxu0 0
    %1898 = vmatprep.subr.bf16.mxu0 0
    %1899 = vmatpush2.bf16.msra.mxu0 0
    %1900 = vmatprep.subr.bf16.mxu0 0
    %1901 = vmatpush2.bf16.msra.mxu0 0
    %1902 = vmatprep.subr.bf16.mxu0 0
    %1903 = vmatpush2.bf16.msra.mxu0 0
    %1904 = vmatprep.subr.bf16.mxu0 0
    %1905 = vmatpush2.bf16.msra.mxu0 0
    %1906 = vmatprep.subr.bf16.mxu0 0
    %1907 = vmatpush2.bf16.msra.mxu0 0
    %1908 = vmatprep.subr.bf16.mxu0 0
    %1909 = vmatpush2.bf16.msra.mxu0 0
    %1910 = vmatprep.mubr.bf16.mxu0 0
    %1911 = vmatmul.mubr.bf16.gmra.mxu0 %v1536
    %v1912 = vpop.f32.mrf.mxu0
    %v1913 = vadd.f32 %v1872, %v1912
    %v1914 = vpop.f32.mrf.mxu0
    %v1915 = vadd.f32 %v1874, %v1914
    %v1916 = vpop.f32.mrf.mxu0
    %v1917 = vpop.f32.mrf.mxu0
    %1918 = vdwg.mxu0
    %v1919 = vmax.f32 %v1913, 0.0
    %v1920 = vmax.f32 %v1915, 0.0
    %v1921 = vpack.c.bf16 %v1919, %v1919
    %v1922 = vpack.c.bf16 %v1920, %v1920
    %v1923 = vld [vmem:[#allocation8] sm:$0xff]
    %v1924 = vld [vmem:[#allocation8 + $0x8] sm:$0xff]
    %v1925 = vld [vmem:[#allocation8 + $0x10] sm:$0xff]
    %v1926 = vld [vmem:[#allocation8 + $0x18] sm:$0xff]
    %v1927 = vld [vmem:[#allocation8 + $0x20] sm:$0xff]
    %v1928 = vld [vmem:[#allocation8 + $0x28] sm:$0xff]
    %v1929 = vld [vmem:[#allocation8 + $0x30] sm:$0xff]
    %v1930 = vld [vmem:[#allocation8 + $0x38] sm:$0xff]
    %v1931 = vld [vmem:[#allocation8 + $0x40] sm:$0xff]
    %v1932 = vld [vmem:[#allocation8 + $0x48] sm:$0xff]
    %v1933 = vld [vmem:[#allocation8 + $0x50] sm:$0xff]
    %v1934 = vld [vmem:[#allocation8 + $0x58] sm:$0xff]
    %v1935 = vld [vmem:[#allocation8 + $0x60] sm:$0xff]
    %v1936 = vld [vmem:[#allocation8 + $0x68] sm:$0xff]
    %v1937 = vld [vmem:[#allocation8 + $0x70] sm:$0xff]
    %v1938 = vld [vmem:[#allocation8 + $0x78] sm:$0xff]
    %v1939 = vld [vmem:[#allocation8 + $0x80] sm:$0xff]
    %v1940 = vld [vmem:[#allocation8 + $0x88] sm:$0xff]
    %v1941 = vld [vmem:[#allocation8 + $0x90] sm:$0xff]
    %v1942 = vld [vmem:[#allocation8 + $0x98] sm:$0xff]
    %v1943 = vld [vmem:[#allocation8 + $0xa0] sm:$0xff]
    %v1944 = vld [vmem:[#allocation8 + $0xa8] sm:$0xff]
    %v1945 = vld [vmem:[#allocation8 + $0xb0] sm:$0xff]
    %v1946 = vld [vmem:[#allocation8 + $0xb8] sm:$0xff]
    %v1947 = vld [vmem:[#allocation8 + $0xc0] sm:$0xff]
    %v1948 = vld [vmem:[#allocation8 + $0xc8] sm:$0xff]
    %v1949 = vld [vmem:[#allocation8 + $0xd0] sm:$0xff]
    %v1950 = vld [vmem:[#allocation8 + $0xd8] sm:$0xff]
    %v1951 = vld [vmem:[#allocation8 + $0xe0] sm:$0xff]
    %v1952 = vld [vmem:[#allocation8 + $0xe8] sm:$0xff]
    %v1953 = vld [vmem:[#allocation8 + $0xf0] sm:$0xff]
    %v1954 = vld [vmem:[#allocation8 + $0xf8] sm:$0xff]
    %v1955 = vld [vmem:[%s6] sm:$0x3]
    %v1957 = vlaneseq
    %v1958 = vshrl.u32 %v1957, 7
    %v1959 = vsub.s32 0, %v1958
    %v1960 = vrot.slane %v1955, %v1959
    %v1961 = vlaneseq
    %v1962 = vshrl.u32 %v1961, 7
    %v1963 = vsub.s32 1, %v1962
    %v1964 = vrot.slane %v1955, %v1963
    %v1999 = vunpack.c.l.b16 %v1923
    %v2000 = vunpack.c.h.b16 %v1923
    %v2001 = vunpack.c.l.b16 %v1924
    %v2002 = vunpack.c.h.b16 %v1924
    %v2003 = vunpack.c.l.b16 %v1925
    %v2004 = vunpack.c.h.b16 %v1925
    %v2005 = vunpack.c.l.b16 %v1926
    %v2006 = vunpack.c.h.b16 %v1926
    %v2007 = vunpack.c.l.b16 %v1927
    %v2008 = vunpack.c.h.b16 %v1927
    %v2009 = vunpack.c.l.b16 %v1928
    %v2010 = vunpack.c.h.b16 %v1928
    %v2011 = vunpack.c.l.b16 %v1929
    %v2012 = vunpack.c.h.b16 %v1929
    %v2013 = vunpack.c.l.b16 %v1930
    %v2014 = vunpack.c.h.b16 %v1930
    %v2015 = vunpack.c.l.b16 %v1931
    %v2016 = vunpack.c.h.b16 %v1931
    %v2017 = vunpack.c.l.b16 %v1932
    %v2018 = vunpack.c.h.b16 %v1932
    %v2019 = vunpack.c.l.b16 %v1933
    %v2020 = vunpack.c.h.b16 %v1933
    %v2021 = vunpack.c.l.b16 %v1934
    %v2022 = vunpack.c.h.b16 %v1934
    %v2023 = vunpack.c.l.b16 %v1935
    %v2024 = vunpack.c.h.b16 %v1935
    %v2025 = vunpack.c.l.b16 %v1936
    %v2026 = vunpack.c.h.b16 %v1936
    %v2027 = vunpack.c.l.b16 %v1937
    %v2028 = vunpack.c.h.b16 %v1937
    %v2029 = vunpack.c.l.b16 %v1938
    %v2030 = vunpack.c.h.b16 %v1938
    %v2031 = vunpack.c.l.b16 %v1939
    %v2032 = vunpack.c.h.b16 %v1939
    %v2033 = vunpack.c.l.b16 %v1940
    %v2034 = vunpack.c.h.b16 %v1940
    %v2035 = vunpack.c.l.b16 %v1941
    %v2036 = vunpack.c.h.b16 %v1941
    %v2037 = vunpack.c.l.b16 %v1942
    %v2038 = vunpack.c.h.b16 %v1942
    %v2039 = vunpack.c.l.b16 %v1943
    %v2040 = vunpack.c.h.b16 %v1943
    %v2041 = vunpack.c.l.b16 %v1944
    %v2042 = vunpack.c.h.b16 %v1944
    %v2043 = vunpack.c.l.b16 %v1945
    %v2044 = vunpack.c.h.b16 %v1945
    %v2045 = vunpack.c.l.b16 %v1946
    %v2046 = vunpack.c.h.b16 %v1946
    %v2047 = vunpack.c.l.b16 %v1947
    %v2048 = vunpack.c.h.b16 %v1947
    %v2049 = vunpack.c.l.b16 %v1948
    %v2050 = vunpack.c.h.b16 %v1948
    %v2051 = vunpack.c.l.b16 %v1949
    %v2052 = vunpack.c.h.b16 %v1949
    %v2053 = vunpack.c.l.b16 %v1950
    %v2054 = vunpack.c.h.b16 %v1950
    %v2055 = vunpack.c.l.b16 %v1951
    %v2056 = vunpack.c.h.b16 %v1951
    %v2057 = vunpack.c.l.b16 %v1952
    %v2058 = vunpack.c.h.b16 %v1952
    %v2059 = vunpack.c.l.b16 %v1953
    %v2060 = vunpack.c.h.b16 %v1953
    %v2061 = vunpack.c.l.b16 %v1954
    %v2062 = vunpack.c.h.b16 %v1954
    %v2063 = vpack.c.b16 %v2001, %v1999
    %v2064 = vpack.c.b16 %v2002, %v2000
    %v2065 = vpack.c.b16 %v2005, %v2003
    %v2066 = vpack.c.b16 %v2006, %v2004
    %v2067 = vpack.c.b16 %v2009, %v2007
    %v2068 = vpack.c.b16 %v2010, %v2008
    %v2069 = vpack.c.b16 %v2013, %v2011
    %v2070 = vpack.c.b16 %v2014, %v2012
    %v2071 = vpack.c.b16 %v2017, %v2015
    %v2072 = vpack.c.b16 %v2018, %v2016
    %v2073 = vpack.c.b16 %v2021, %v2019
    %v2074 = vpack.c.b16 %v2022, %v2020
    %v2075 = vpack.c.b16 %v2025, %v2023
    %v2076 = vpack.c.b16 %v2026, %v2024
    %v2077 = vpack.c.b16 %v2029, %v2027
    %v2078 = vpack.c.b16 %v2030, %v2028
    %v2079 = vpack.c.b16 %v2033, %v2031
    %v2080 = vpack.c.b16 %v2034, %v2032
    %v2081 = vpack.c.b16 %v2037, %v2035
    %v2082 = vpack.c.b16 %v2038, %v2036
    %v2083 = vpack.c.b16 %v2041, %v2039
    %v2084 = vpack.c.b16 %v2042, %v2040
    %v2085 = vpack.c.b16 %v2045, %v2043
    %v2086 = vpack.c.b16 %v2046, %v2044
    %v2087 = vpack.c.b16 %v2049, %v2047
    %v2088 = vpack.c.b16 %v2050, %v2048
    %v2089 = vpack.c.b16 %v2053, %v2051
    %v2090 = vpack.c.b16 %v2054, %v2052
    %v2091 = vpack.c.b16 %v2057, %v2055
    %v2092 = vpack.c.b16 %v2058, %v2056
    %v2093 = vpack.c.b16 %v2061, %v2059
    %v2094 = vpack.c.b16 %v2062, %v2060
    %2127 = vmatprep.subr.bf16.mxu0 %v2078
    %2128 = vmatpush1.bf16.msra.mxu0 %v2077
    %2129 = vmatprep.subr.bf16.mxu0 %v2076
    %2130 = vmatpush1.bf16.msra.mxu0 %v2075
    %2131 = vmatprep.subr.bf16.mxu0 %v2074
    %2132 = vmatpush1.bf16.msra.mxu0 %v2073
    %2133 = vmatprep.subr.bf16.mxu0 %v2072
    %2134 = vmatpush1.bf16.msra.mxu0 %v2071
    %2135 = vmatprep.subr.bf16.mxu0 %v2070
    %2136 = vmatpush1.bf16.msra.mxu0 %v2069
    %2137 = vmatprep.subr.bf16.mxu0 %v2068
    %2138 = vmatpush1.bf16.msra.mxu0 %v2067
    %2139 = vmatprep.subr.bf16.mxu0 %v2066
    %2140 = vmatpush1.bf16.msra.mxu0 %v2065
    %2141 = vmatprep.subr.bf16.mxu0 %v2064
    %2142 = vmatpush1.bf16.msra.mxu0 %v2063
    %2143 = vmatprep.subr.bf16.mxu0 %v2094
    %2144 = vmatpush2.bf16.msra.mxu0 %v2093
    %2145 = vmatprep.subr.bf16.mxu0 %v2092
    %2146 = vmatpush2.bf16.msra.mxu0 %v2091
    %2147 = vmatprep.subr.bf16.mxu0 %v2090
    %2148 = vmatpush2.bf16.msra.mxu0 %v2089
    %2149 = vmatprep.subr.bf16.mxu0 %v2088
    %2150 = vmatpush2.bf16.msra.mxu0 %v2087
    %2151 = vmatprep.subr.bf16.mxu0 %v2086
    %2152 = vmatpush2.bf16.msra.mxu0 %v2085
    %2153 = vmatprep.subr.bf16.mxu0 %v2084
    %2154 = vmatpush2.bf16.msra.mxu0 %v2083
    %2155 = vmatprep.subr.bf16.mxu0 %v2082
    %2156 = vmatpush2.bf16.msra.mxu0 %v2081
    %2157 = vmatprep.subr.bf16.mxu0 %v2080
    %2158 = vmatpush2.bf16.msra.mxu0 %v2079
    %2159 = vmatprep.mubr.bf16.mxu0 %v1922
    %2160 = vmatmul.mubr.bf16.gmra.mxu0 %v1921
    %v2161 = vpop.f32.mrf.mxu0
    %v2162 = vadd.f32 %v1960, %v2161
    %v2163 = vpop.f32.mrf.mxu0
    %v2164 = vadd.f32 %v1964, %v2163
    %v2165 = vpop.f32.mrf.mxu0
    %v2166 = vpop.f32.mrf.mxu0
    %2167 = vdwg.mxu0
    %v2168 = vmax.f32 %v2162, 0.0
    %v2169 = vmax.f32 %v2164, 0.0
    %v2170 = vpack.c.bf16 %v2168, %v2168
    %v2171 = vpack.c.bf16 %v2169, %v2169
    %v2172 = vld [vmem:[#allocation10] sm:$0xf]
    %v2173 = vld [vmem:[#allocation10 + $0x4] sm:$0xf]
    %v2174 = vld [vmem:[#allocation10 + $0x8] sm:$0xf]
    %v2175 = vld [vmem:[#allocation10 + $0xc] sm:$0xf]
    %v2176 = vld [vmem:[#allocation10 + $0x10] sm:$0xf]
    %v2177 = vld [vmem:[#allocation10 + $0x14] sm:$0xf]
    %v2178 = vld [vmem:[#allocation10 + $0x18] sm:$0xf]
    %v2179 = vld [vmem:[#allocation10 + $0x1c] sm:$0xf]
    %v2180 = vld [vmem:[#allocation10 + $0x20] sm:$0xf]
    %v2181 = vld [vmem:[#allocation10 + $0x24] sm:$0xf]
    %v2182 = vld [vmem:[#allocation10 + $0x28] sm:$0xf]
    %v2183 = vld [vmem:[#allocation10 + $0x2c] sm:$0xf]
    %v2184 = vld [vmem:[#allocation10 + $0x30] sm:$0xf]
    %v2185 = vld [vmem:[#allocation10 + $0x34] sm:$0xf]
    %v2186 = vld [vmem:[#allocation10 + $0x38] sm:$0xf]
    %v2187 = vld [vmem:[#allocation10 + $0x3c] sm:$0xf]
    %v2188 = vld [vmem:[#allocation10 + $0x40] sm:$0xf]
    %v2189 = vld [vmem:[#allocation10 + $0x44] sm:$0xf]
    %v2190 = vld [vmem:[#allocation10 + $0x48] sm:$0xf]
    %v2191 = vld [vmem:[#allocation10 + $0x4c] sm:$0xf]
    %v2192 = vld [vmem:[#allocation10 + $0x50] sm:$0xf]
    %v2193 = vld [vmem:[#allocation10 + $0x54] sm:$0xf]
    %v2194 = vld [vmem:[#allocation10 + $0x58] sm:$0xf]
    %v2195 = vld [vmem:[#allocation10 + $0x5c] sm:$0xf]
    %v2196 = vld [vmem:[#allocation10 + $0x60] sm:$0xf]
    %v2197 = vld [vmem:[#allocation10 + $0x64] sm:$0xf]
    %v2198 = vld [vmem:[#allocation10 + $0x68] sm:$0xf]
    %v2199 = vld [vmem:[#allocation10 + $0x6c] sm:$0xf]
    %v2200 = vld [vmem:[#allocation10 + $0x70] sm:$0xf]
    %v2201 = vld [vmem:[#allocation10 + $0x74] sm:$0xf]
    %v2202 = vld [vmem:[#allocation10 + $0x78] sm:$0xf]
    %v2203 = vld [vmem:[#allocation10 + $0x7c] sm:$0xf]
    %v2204 = vld [vmem:[%s8] sm:$0x1]
    %v2206 = vlaneseq
    %v2207 = vshrl.u32 %v2206, 7
    %v2208 = vsub.s32 0, %v2207
    %v2209 = vrot.slane %v2204, %v2208
    %v2243 = vunpack.c.l.b16 %v2172
    %v2244 = vunpack.c.l.b16 %v2173
    %v2245 = vunpack.c.l.b16 %v2174
    %v2246 = vunpack.c.l.b16 %v2175
    %v2247 = vunpack.c.l.b16 %v2176
    %v2248 = vunpack.c.l.b16 %v2177
    %v2249 = vunpack.c.l.b16 %v2178
    %v2250 = vunpack.c.l.b16 %v2179
    %v2251 = vunpack.c.l.b16 %v2180
    %v2252 = vunpack.c.l.b16 %v2181
    %v2253 = vunpack.c.l.b16 %v2182
    %v2254 = vunpack.c.l.b16 %v2183
    %v2255 = vunpack.c.l.b16 %v2184
    %v2256 = vunpack.c.l.b16 %v2185
    %v2257 = vunpack.c.l.b16 %v2186
    %v2258 = vunpack.c.l.b16 %v2187
    %v2259 = vunpack.c.l.b16 %v2188
    %v2260 = vunpack.c.l.b16 %v2189
    %v2261 = vunpack.c.l.b16 %v2190
    %v2262 = vunpack.c.l.b16 %v2191
    %v2263 = vunpack.c.l.b16 %v2192
    %v2264 = vunpack.c.l.b16 %v2193
    %v2265 = vunpack.c.l.b16 %v2194
    %v2266 = vunpack.c.l.b16 %v2195
    %v2267 = vunpack.c.l.b16 %v2196
    %v2268 = vunpack.c.l.b16 %v2197
    %v2269 = vunpack.c.l.b16 %v2198
    %v2270 = vunpack.c.l.b16 %v2199
    %v2271 = vunpack.c.l.b16 %v2200
    %v2272 = vunpack.c.l.b16 %v2201
    %v2273 = vunpack.c.l.b16 %v2202
    %v2274 = vunpack.c.l.b16 %v2203
    %v2275 = vpack.c.b16 %v2244, %v2243
    %v2276 = vpack.c.b16 %v2246, %v2245
    %v2277 = vpack.c.b16 %v2248, %v2247
    %v2278 = vpack.c.b16 %v2250, %v2249
    %v2279 = vpack.c.b16 %v2252, %v2251
    %v2280 = vpack.c.b16 %v2254, %v2253
    %v2281 = vpack.c.b16 %v2256, %v2255
    %v2282 = vpack.c.b16 %v2258, %v2257
    %v2283 = vpack.c.b16 %v2260, %v2259
    %v2284 = vpack.c.b16 %v2262, %v2261
    %v2285 = vpack.c.b16 %v2264, %v2263
    %v2286 = vpack.c.b16 %v2266, %v2265
    %v2287 = vpack.c.b16 %v2268, %v2267
    %v2288 = vpack.c.b16 %v2270, %v2269
    %v2289 = vpack.c.b16 %v2272, %v2271
    %v2290 = vpack.c.b16 %v2274, %v2273
    %2307 = vmatprep.subr.bf16.mxu0 0
    %2308 = vmatpush1.bf16.msra.mxu0 %v2282
    %2309 = vmatprep.subr.bf16.mxu0 0
    %2310 = vmatpush1.bf16.msra.mxu0 %v2281
    %2311 = vmatprep.subr.bf16.mxu0 0
    %2312 = vmatpush1.bf16.msra.mxu0 %v2280
    %2313 = vmatprep.subr.bf16.mxu0 0
    %2314 = vmatpush1.bf16.msra.mxu0 %v2279
    %2315 = vmatprep.subr.bf16.mxu0 0
    %2316 = vmatpush1.bf16.msra.mxu0 %v2278
    %2317 = vmatprep.subr.bf16.mxu0 0
    %2318 = vmatpush1.bf16.msra.mxu0 %v2277
    %2319 = vmatprep.subr.bf16.mxu0 0
    %2320 = vmatpush1.bf16.msra.mxu0 %v2276
    %2321 = vmatprep.subr.bf16.mxu0 0
    %2322 = vmatpush1.bf16.msra.mxu0 %v2275
    %2323 = vmatprep.subr.bf16.mxu0 0
    %2324 = vmatpush2.bf16.msra.mxu0 %v2290
    %2325 = vmatprep.subr.bf16.mxu0 0
    %2326 = vmatpush2.bf16.msra.mxu0 %v2289
    %2327 = vmatprep.subr.bf16.mxu0 0
    %2328 = vmatpush2.bf16.msra.mxu0 %v2288
    %2329 = vmatprep.subr.bf16.mxu0 0
    %2330 = vmatpush2.bf16.msra.mxu0 %v2287
    %2331 = vmatprep.subr.bf16.mxu0 0
    %2332 = vmatpush2.bf16.msra.mxu0 %v2286
    %2333 = vmatprep.subr.bf16.mxu0 0
    %2334 = vmatpush2.bf16.msra.mxu0 %v2285
    %2335 = vmatprep.subr.bf16.mxu0 0
    %2336 = vmatpush2.bf16.msra.mxu0 %v2284
    %2337 = vmatprep.subr.bf16.mxu0 0
    %2338 = vmatpush2.bf16.msra.mxu0 %v2283
    %2339 = vmatprep.mubr.bf16.mxu0 %v2171
    %2340 = vmatmul.mubr.bf16.gmra.mxu0 %v2170
    %v2341 = vpop.f32.mrf.mxu0
    %v2342 = vadd.f32 %v2209, %v2341
    %v2343 = vpop.f32.mrf.mxu0
    %v2344 = vpop.f32.mrf.mxu0
    %v2345 = vpop.f32.mrf.mxu0
    %2346 = vdwg.mxu0
    %2347 = vst [vmem:[#allocation11] sm:$0xff] %v2342
    // Predicated region
    $region58: #{tpu_custom_call.1} parent=1 // pred_check
      _
    $region59: #{tpu_custom_call.1} parent=1 // pred_check_branch
      %2349 = sbr.rel (0) target = $region61
    $region60: #{tpu_custom_call.1} parent=1 // pred_region
      %s2351 = ssub.s32 128, 128
      %2352 = vsyncadd [#allocation4], %s2351
      %s2354 = sshll.u32 [#allocation11], 4
      %s2355 = int_to_ptr.vmem [resolvable:$true] %s2354
      %2357 = dma.vmem_to_hbm [thread:$0]  %s2355, 128, %s9, [#allocation4]
    $region61: #{tpu_custom_call.1} parent=1 // pred_fallthru
      _
    // Predicated region
    $region62: #{tpu_custom_call.1} parent=1 // pred_check
      _
    $region63: #{tpu_custom_call.1} parent=1 // pred_check_branch
      %2359 = sbr.rel (0) target = $region65
    $region64: #{tpu_custom_call.1} parent=1 // pred_region
      %2360 = dma.done [#allocation4], 128
    $region65: #{tpu_custom_call.1} parent=1 // pred_fallthru
      _
    %2361 = vsyncpa [#allocation3], 1
    %2362 = vsyncpa [#allocation6], 1
    %2363 = vsyncpa [#allocation9], 1
    %2364 = vsyncpa [#allocation4], 1

</llo_original>
